<compile_context>
chip_gen: v6e
topology: v6e:2x2x1
jax: 0.10.0
libtpu: 0.0.40
codegen_flags: <defaults>
</compile_context>

<pallas_src>
import functools

import jax
import jax.numpy as jnp
from jax import lax
from jax.experimental import pallas as pl
from jax.experimental.pallas import tpu as pltpu

BN_EPS = 1e-5

# Per-grid-step VMEM working-set budget (double-buffered blocks).  Sized for
# the smallest generation (v7x: 64 MiB physical VMEM per TensorCore); v5e/v6e
# (128 MiB) could use a larger per-generation table.
_PER_STEP_VMEM_BUDGET = 6 * 1024 * 1024
_VMEM_LIMIT_BYTES = 48 * 1024 * 1024   # leaves headroom even on v7x


def _rup(a, b):
    return (a + b - 1) // b * b


def _conv_stats_kernel(x_ref, w_ref, conv_ref, psum_ref, psq_ref, *,
                       kh, kw, stride, dilation, h_out, w_out,
                       tile_m, tile_mp):
    """Pass 1: conv for one tile of images + BN partial statistics.

    x_ref:    (TILE_N, Hp, Wp, C_in)   bf16 padded NHWC input block
    w_ref:    (kh*kw*C_in, C_out)      bf16 weights (resident, same block)
    conv_ref: (C_out, TILE_MP)         bf16 lane-dense conv output
    psum_ref / psq_ref: (1, 1, C_out)  f32 per-tile sum / sum-of-squares
    """
    c_in = x_ref.shape[3]
    c_out = w_ref.shape[1]

    # Build the (TILE_M, kh*kw*C_in) patch matrix directly from the ref: one
    # shifted window load per tap (no whole-block value materialisation),
    # then a single K = kh*kw*C_in MXU contraction.
    x_full = x_ref[...] if stride != 1 else None   # only loaded if needed
    taps = []
    for i in range(kh):                            # static unroll over taps
        for j in range(kw):
            ri, rj = i * dilation, j * dilation
            if stride == 1:
                tap = x_ref[:, pl.ds(ri, h_out), pl.ds(rj, w_out), :]
            else:
                tap = x_full[:, ri:ri + stride * (h_out - 1) + 1:stride,
                             rj:rj + stride * (w_out - 1) + 1:stride, :]
            taps.append(tap)
    patches = jnp.concatenate(taps, axis=-1).reshape(tile_m, kh * kw * c_in)

    acc = jnp.dot(patches, w_ref[...], preferred_element_type=jnp.float32)

    # bf16 intermediate (halves the HBM round trip); transpose at half width.
    acc_bf = acc.astype(jnp.bfloat16)
    conv_t = acc_bf.T                              # (C_out, TILE_M) lane-dense
    if tile_mp > tile_m:                           # static pad to 128-aligned
        conv_t = jnp.pad(conv_t, ((0, 0), (0, tile_mp - tile_m)))
    conv_ref[...] = conv_t

    # BN partials over exactly the values pass 2 will normalize (bf16-rounded),
    # accumulated in f32.
    # TODO(synk): E[x^2]-E[x]^2 in f32 can cancel for very large m; switch to
    # mean-shifted per-tile partials if that regime matters.
    accs = acc_bf.astype(jnp.float32)
    psum_ref[...] = jnp.sum(accs, axis=0).reshape(1, 1, c_out)
    psq_ref[...] = jnp.sum(accs * accs, axis=0).reshape(1, 1, c_out)


def _bn_relu_kernel(conv_ref, scale_ref, shift_ref, out_ref):
    """Pass 2: y = relu(conv * scale + shift); bf16 in, f32 out, lane-dense."""
    y = conv_ref[...].astype(jnp.float32) * scale_ref[...] + shift_ref[...]
    out_ref[...] = jnp.maximum(y, 0.0)


def _choose_tile_n(n, per_image_bytes, budget):
    """Largest divisor of n that fits the budget and keeps >= 2 grid steps."""
    best = 1
    for t in range(1, n + 1):
        if n % t:
            continue
        if t * per_image_bytes > budget:
            continue
        if n // t >= 2:                 # >= 2 steps: megacore + pipelining
            best = max(best, t)
    return best


def _choose_col_tile(m_total, target=32768):
    """Largest 128-multiple divisor of m_total <= target (>=2 steps if possible)."""
    limit = min(target, m_total if m_total < 256 else m_total // 2)
    best = 128
    d = 128
    while d <= limit:
        if m_total % d == 0:
            best = d
        d += 128
    return best


@functools.partial(jax.jit, static_argnames=("stride", "padding", "dilation"))
def conv_module_forward(x, weight, gamma, beta, *, stride=1, padding=1,
                        dilation=1):
    """ConvModule forward: conv (no bias) -> BN (batch stats) -> ReLU.

    x:      (N, C_in, H, W)            float32, NCHW (PyTorch convention)
    weight: (C_out, C_in, kh, kw)      float32 (torch Conv2d layout)
    gamma, beta: (C_out,)              BN affine parameters
    returns (N, C_out, H_out, W_out)   float32, NCHW
    """
    n, c_in, h, w = x.shape
    c_out, _, kh, kw = weight.shape
    h_out = (h + 2 * padding - dilation * (kh - 1) - 1) // stride + 1
    w_out = (w + 2 * padding - dilation * (kw - 1) - 1) // stride + 1
    m = n * h_out * w_out
    k_dim = kh * kw * c_in

    # One-time boundary layout change (NCHW -> padded NHWC bf16).  Under jit,
    # XLA fuses transpose + pad + convert into a single HBM pass.
    x_nhwc = jnp.transpose(x, (0, 2, 3, 1))
    xp = jnp.pad(x_nhwc, ((0, 0), (padding, padding),
                          (padding, padding), (0, 0))).astype(jnp.bfloat16)
    w2d = jnp.transpose(weight, (2, 3, 1, 0)).reshape(k_dim, c_out)
    w2d = w2d.astype(jnp.bfloat16)
    hp, wp = h + 2 * padding, w + 2 * padding

    # ---- tile selection: whole images per step keep tap windows rectangular.
    cols_per_image = h_out * w_out
    # Conservative per-image VMEM footprint with (sublane, lane) layout padding.
    in_img = hp * _rup(wp, 16) * _rup(c_in, 128) * 2          # bf16 input block
    out_img = _rup(c_out, 16) * _rup(cols_per_image, 128) * 2  # bf16 conv block
    patches_img = cols_per_image * _rup(k_dim, 128) * 2        # patch matrix
    acc_img = cols_per_image * _rup(c_out, 128) * 4            # f32 dot result
    per_image = 2 * (in_img + out_img) + patches_img + acc_img  # 2x = dbl buf
    tile_n = _choose_tile_n(n, per_image, _PER_STEP_VMEM_BUDGET)
    num_tiles = n // tile_n
    tile_m = tile_n * cols_per_image
    tile_mp = _rup(tile_m, 128)          # lane-dense, unmasked stores
    m_padded = num_tiles * tile_mp

    kern1 = functools.partial(_conv_stats_kernel, kh=kh, kw=kw, stride=stride,
                              dilation=dilation, h_out=h_out, w_out=w_out,
                              tile_m=tile_m, tile_mp=tile_mp)
    cparams = pltpu.CompilerParams(dimension_semantics=("parallel",),
                                   vmem_limit_bytes=_VMEM_LIMIT_BYTES)
    flops1 = 2 * m * k_dim * c_out
    bytes1 = (xp.size * 2 + w2d.size * 2 + m_padded * c_out * 2
              + 2 * num_tiles * c_out * 4)

    conv_t, psum, psq = pl.pallas_call(
        kern1,
        grid=(num_tiles,),
        in_specs=[
            pl.BlockSpec((tile_n, hp, wp, c_in), lambda t: (t, 0, 0, 0)),
            pl.BlockSpec((k_dim, c_out), lambda t: (0, 0)),
        ],
        out_specs=(
            pl.BlockSpec((c_out, tile_mp), lambda t: (0, t)),
            pl.BlockSpec((1, 1, c_out), lambda t: (t, 0, 0)),
            pl.BlockSpec((1, 1, c_out), lambda t: (t, 0, 0)),
        ),
        out_shape=(
            jax.ShapeDtypeStruct((c_out, m_padded), jnp.bfloat16),
            jax.ShapeDtypeStruct((num_tiles, 1, c_out), jnp.float32),
            jax.ShapeDtypeStruct((num_tiles, 1, c_out), jnp.float32),
        ),
        compiler_params=cparams,
        cost_estimate=pl.CostEstimate(flops=flops1, transcendentals=0,
                                      bytes_accessed=bytes1),
    )(xp, w2d)

    # ---- finalize BN statistics once per channel (tiny XLA ops, f32) ----
    ssum = jnp.sum(psum, axis=(0, 1))
    ssq = jnp.sum(psq, axis=(0, 1))
    mean = ssum / m
    var = jnp.maximum(ssq / m - mean * mean, 0.0)     # biased batch variance
    inv = lax.rsqrt(var + BN_EPS)                     # one rsqrt per channel
    scale = (gamma * inv).reshape(c_out, 1).astype(jnp.float32)
    shift = (beta - mean * gamma * inv).reshape(c_out, 1).astype(jnp.float32)

    # ---- pass 2: streaming BN+ReLU over wide lane-dense column blocks ----
    col_tile = _choose_col_tile(m_padded)
    n_col = m_padded // col_tile
    flops2 = 3 * m_padded * c_out
    bytes2 = m_padded * c_out * (2 + 4) + 2 * c_out * 4
    y_t = pl.pallas_call(
        _bn_relu_kernel,
        grid=(n_col,),
        in_specs=[
            pl.BlockSpec((c_out, col_tile), lambda t: (0, t)),
            pl.BlockSpec((c_out, 1), lambda t: (0, 0)),
            pl.BlockSpec((c_out, 1), lambda t: (0, 0)),
        ],
        out_specs=pl.BlockSpec((c_out, col_tile), lambda t: (0, t)),
        out_shape=jax.ShapeDtypeStruct((c_out, m_padded), jnp.float32),
        compiler_params=cparams,
        cost_estimate=pl.CostEstimate(flops=flops2, transcendentals=0,
                                      bytes_accessed=bytes2),
    )(conv_t, scale, shift)

    # ---- strip M padding + single boundary layout change back to NCHW ----
    y = y_t.reshape(c_out, num_tiles, tile_mp)[:, :, :tile_m]
    y = y.reshape(c_out, n, h_out, w_out)
    return jnp.transpose(y, (1, 0, 2, 3))


def _reference(x, weight, gamma, beta, stride, padding, dilation,
               match_kernel_precision=False):
    """Pure-JAX reference: conv -> BN (batch stats, biased var) -> ReLU."""
    xr, wr = x, weight
    if match_kernel_precision:
        xr, wr = x.astype(jnp.bfloat16), weight.astype(jnp.bfloat16)
    y = lax.conv_general_dilated(
        xr, wr, window_strides=(stride, stride),
        padding=[(padding, padding), (padding, padding)],
        rhs_dilation=(dilation, dilation),
        dimension_numbers=("NCHW", "OIHW", "NCHW"),
        preferred_element_type=jnp.float32)
    if match_kernel_precision:
        y = y.astype(jnp.bfloat16).astype(jnp.float32)  # bf16 intermediate
    mean = jnp.mean(y, axis=(0, 2, 3), keepdims=True)
    var = jnp.mean((y - mean) ** 2, axis=(0, 2, 3), keepdims=True)
    yn = (y - mean) * lax.rsqrt(var + BN_EPS)
    yn = yn * gamma.reshape(1, -1, 1, 1) + beta.reshape(1, -1, 1, 1)
    return jnp.maximum(yn, 0.0)


if __name__ == "__main__":
    # ConvModule(in_channels=4, out_channels=8, kernel_size=3, padding=1)
    # -> conv bias=False (norm present), BN(8), ReLU, activate_last=True.
    N, C_IN, H, W = 2, 4, 16, 16
    C_OUT, KH, KW = 8, 3, 3
    STRIDE, PADDING, DILATION = 1, 1, 1

    key = jax.random.PRNGKey(0)
    kx, kw_ = jax.random.split(key)
    x = jax.random.normal(kx, (N, C_IN, H, W), dtype=jnp.float32)

    # kaiming_normal_(nonlinearity='relu', mode='fan_in'): std = sqrt(2/fan_in)
    fan_in = C_IN * KH * KW
    weight = jax.random.normal(kw_, (C_OUT, C_IN, KH, KW),
                               dtype=jnp.float32) * jnp.sqrt(2.0 / fan_in)
    gamma = jnp.ones((C_OUT,), jnp.float32)    # norm.weight init to 1
    beta = jnp.zeros((C_OUT,), jnp.float32)    # norm.bias default 0

    out = conv_module_forward(x, weight, gamma, beta, stride=STRIDE,
                              padding=PADDING, dilation=DILATION)
    out = jax.block_until_ready(out)
    assert out.shape == (N, C_OUT, H, W), out.shape

    # Tight check at matched precision (bf16 MXU inputs, f32 accumulation,
    # bf16-rounded conv intermediate).
    ref_bf16 = _reference(x, weight, gamma, beta, STRIDE, PADDING, DILATION,
                          match_kernel_precision=True)
    assert jnp.allclose(out, ref_bf16, atol=5e-3, rtol=5e-3), \
        float(jnp.max(jnp.abs(out - ref_bf16)))

    # Loose sanity check against the full-f32 module math (bf16 MXU inputs and
    # bf16 intermediate are intentional perf choices; f32 accumulation and f32
    # BN/ReLU bound the error).
    ref_f32 = _reference(x, weight, gamma, beta, STRIDE, PADDING, DILATION,
                         match_kernel_precision=False)
    assert jnp.allclose(out, ref_f32, atol=1e-1, rtol=1e-1), \
        float(jnp.max(jnp.abs(out - ref_f32)))

    print("KERNEL_OK")
</pallas_src>

<mosaic_0001>
module attributes {stable_mosaic.version = 11 : i64} {
  func.func @_conv_stats_kernel(%arg0: i32, %arg1: memref<1x18x18x4xbf16, #tpu.memory_space<vmem>>, %arg2: memref<36x8xbf16, #tpu.memory_space<vmem>>, %arg3: memref<8x256xbf16, #tpu.memory_space<vmem>>, %arg4: memref<1x1x8xf32, #tpu.memory_space<vmem>>, %arg5: memref<1x1x8xf32, #tpu.memory_space<vmem>>) attributes {dimension_semantics = [#tpu.dimension_semantics<parallel>], iteration_bounds = array<i64: 2>, scalar_prefetch = 0 : i64, scratch_operands = 0 : i64, tpu.core_type = #tpu.core_type<tc>, window_params = [{transform_indices = @transform_0, window_bounds = array<i64: 1, 18, 18, 4>}, {pipeline_mode = #tpu.pipeline_mode<synchronous>, transform_indices = @transform_1, window_bounds = array<i64: 36, 8>}, {transform_indices = @transform_2, window_bounds = array<i64: 8, 256>}, {transform_indices = @transform_3, window_bounds = array<i64: 1, 1, 8>}, {transform_indices = @transform_4, window_bounds = array<i64: 1, 1, 8>}]} {
    %c0 = arith.constant 0 : index
    %c0_0 = arith.constant 0 : index
    %c0_1 = arith.constant 0 : index
    %c0_2 = arith.constant 0 : index
    %0 = vector.load %arg1[%c0, %c0_0, %c0_1, %c0_2] : memref<1x18x18x4xbf16, #tpu.memory_space<vmem>>, vector<1x16x16x4xbf16>
    %c0_3 = arith.constant 0 : index
    %c0_4 = arith.constant 0 : index
    %c1 = arith.constant 1 : index
    %c0_5 = arith.constant 0 : index
    %1 = vector.load %arg1[%c0_3, %c0_4, %c1, %c0_5] : memref<1x18x18x4xbf16, #tpu.memory_space<vmem>>, vector<1x16x16x4xbf16>
    %c0_6 = arith.constant 0 : index
    %c0_7 = arith.constant 0 : index
    %c2 = arith.constant 2 : index
    %c0_8 = arith.constant 0 : index
    %2 = vector.load %arg1[%c0_6, %c0_7, %c2, %c0_8] : memref<1x18x18x4xbf16, #tpu.memory_space<vmem>>, vector<1x16x16x4xbf16>
    %c0_9 = arith.constant 0 : index
    %c1_10 = arith.constant 1 : index
    %c0_11 = arith.constant 0 : index
    %c0_12 = arith.constant 0 : index
    %3 = vector.load %arg1[%c0_9, %c1_10, %c0_11, %c0_12] : memref<1x18x18x4xbf16, #tpu.memory_space<vmem>>, vector<1x16x16x4xbf16>
    %c0_13 = arith.constant 0 : index
    %c1_14 = arith.constant 1 : index
    %c1_15 = arith.constant 1 : index
    %c0_16 = arith.constant 0 : index
    %4 = vector.load %arg1[%c0_13, %c1_14, %c1_15, %c0_16] : memref<1x18x18x4xbf16, #tpu.memory_space<vmem>>, vector<1x16x16x4xbf16>
    %c0_17 = arith.constant 0 : index
    %c1_18 = arith.constant 1 : index
    %c2_19 = arith.constant 2 : index
    %c0_20 = arith.constant 0 : index
    %5 = vector.load %arg1[%c0_17, %c1_18, %c2_19, %c0_20] : memref<1x18x18x4xbf16, #tpu.memory_space<vmem>>, vector<1x16x16x4xbf16>
    %c0_21 = arith.constant 0 : index
    %c2_22 = arith.constant 2 : index
    %c0_23 = arith.constant 0 : index
    %c0_24 = arith.constant 0 : index
    %6 = vector.load %arg1[%c0_21, %c2_22, %c0_23, %c0_24] : memref<1x18x18x4xbf16, #tpu.memory_space<vmem>>, vector<1x16x16x4xbf16>
    %c0_25 = arith.constant 0 : index
    %c2_26 = arith.constant 2 : index
    %c1_27 = arith.constant 1 : index
    %c0_28 = arith.constant 0 : index
    %7 = vector.load %arg1[%c0_25, %c2_26, %c1_27, %c0_28] : memref<1x18x18x4xbf16, #tpu.memory_space<vmem>>, vector<1x16x16x4xbf16>
    %c0_29 = arith.constant 0 : index
    %c2_30 = arith.constant 2 : index
    %c2_31 = arith.constant 2 : index
    %c0_32 = arith.constant 0 : index
    %8 = vector.load %arg1[%c0_29, %c2_30, %c2_31, %c0_32] : memref<1x18x18x4xbf16, #tpu.memory_space<vmem>>, vector<1x16x16x4xbf16>
    %9 = tpu.concatenate %0, %1, %2, %3, %4, %5, %6, %7, %8 in 3 : vector<1x16x16x4xbf16>, vector<1x16x16x4xbf16>, vector<1x16x16x4xbf16>, vector<1x16x16x4xbf16>, vector<1x16x16x4xbf16>, vector<1x16x16x4xbf16>, vector<1x16x16x4xbf16>, vector<1x16x16x4xbf16>, vector<1x16x16x4xbf16> -> vector<1x16x16x36xbf16>
    %10 = vector.shape_cast %9 : vector<1x16x16x36xbf16> to vector<256x36xbf16>
    %c0_33 = arith.constant 0 : index
    %c0_34 = arith.constant 0 : index
    %11 = vector.load %arg2[%c0_33, %c0_34] : memref<36x8xbf16, #tpu.memory_space<vmem>>, vector<36x8xbf16>
    %cst = arith.constant dense<0.000000e+00> : vector<256x8xf32>
    %12 = tpu.matmul %10, %11, %cst {dimension_numbers = #tpu.dot_dimension_numbers<[1], [0], [0], [1], [0, 0, 1, 1], [], []>} : vector<256x36xbf16>, vector<36x8xbf16>, vector<256x8xf32> -> vector<256x8xf32>
    %13 = arith.truncf %12 : vector<256x8xf32> to vector<256x8xbf16>
    %14 = tpu.transpose %13, [1, 0] : vector<256x8xbf16> -> vector<8x256xbf16>
    %c0_35 = arith.constant 0 : index
    %c0_36 = arith.constant 0 : index
    %15 = vector.load %arg3[%c0_35, %c0_36] : memref<8x256xbf16, #tpu.memory_space<vmem>>, vector<8x256xbf16>
    tpu.vector_store %arg3[%c0_35, %c0_36], %14 {strides = array<i32>} : memref<8x256xbf16, #tpu.memory_space<vmem>>, vector<8x256xbf16>,
    %16 = arith.extf %13 : vector<256x8xbf16> to vector<256x8xf32>
    %cst_37 = arith.constant dense<0.000000e+00> : vector<8xf32>
    %17 = vector.multi_reduction <add>, %16, %cst_37 [0] : vector<256x8xf32> to vector<8xf32>
    %18 = vector.shape_cast %17 : vector<8xf32> to vector<1x1x8xf32>
    %c0_38 = arith.constant 0 : index
    %c0_39 = arith.constant 0 : index
    %c0_40 = arith.constant 0 : index
    %19 = vector.load %arg4[%c0_38, %c0_39, %c0_40] : memref<1x1x8xf32, #tpu.memory_space<vmem>>, vector<1x1x8xf32>
    tpu.vector_store %arg4[%c0_38, %c0_39, %c0_40], %18 {strides = array<i32>} : memref<1x1x8xf32, #tpu.memory_space<vmem>>, vector<1x1x8xf32>,
    %20 = arith.mulf %16, %16 : vector<256x8xf32>
    %cst_41 = arith.constant dense<0.000000e+00> : vector<8xf32>
    %21 = vector.multi_reduction <add>, %20, %cst_41 [0] : vector<256x8xf32> to vector<8xf32>
    %22 = vector.shape_cast %21 : vector<8xf32> to vector<1x1x8xf32>
    %c0_42 = arith.constant 0 : index
    %c0_43 = arith.constant 0 : index
    %c0_44 = arith.constant 0 : index
    %23 = vector.load %arg5[%c0_42, %c0_43, %c0_44] : memref<1x1x8xf32, #tpu.memory_space<vmem>>, vector<1x1x8xf32>
    tpu.vector_store %arg5[%c0_42, %c0_43, %c0_44], %22 {strides = array<i32>} : memref<1x1x8xf32, #tpu.memory_space<vmem>>, vector<1x1x8xf32>,
    return
  }
  func.func @transform_0(%arg0: i32) -> (i32, i32, i32, i32) {
    %c0_i32 = arith.constant 0 : i32
    %c0_i32_0 = arith.constant 0 : i32
    %c0_i32_1 = arith.constant 0 : i32
    %c0_i32_2 = arith.constant 0 : i32
    return %arg0, %c0_i32, %c0_i32_0, %c0_i32_1 : i32, i32, i32, i32
  }
  func.func @transform_1(%arg0: i32) -> (i32, i32) {
    %c0_i32 = arith.constant 0 : i32
    %c0_i32_0 = arith.constant 0 : i32
    %c0_i32_1 = arith.constant 0 : i32
    return %c0_i32, %c0_i32_0 : i32, i32
  }
  func.func @transform_2(%arg0: i32) -> (i32, i32) {
    %c0_i32 = arith.constant 0 : i32
    %c0_i32_0 = arith.constant 0 : i32
    return %c0_i32, %arg0 : i32, i32
  }
  func.func @transform_3(%arg0: i32) -> (i32, i32, i32) {
    %c0_i32 = arith.constant 0 : i32
    %c0_i32_0 = arith.constant 0 : i32
    %c0_i32_1 = arith.constant 0 : i32
    return %arg0, %c0_i32, %c0_i32_0 : i32, i32, i32
  }
  func.func @transform_4(%arg0: i32) -> (i32, i32, i32) {
    %c0_i32 = arith.constant 0 : i32
    %c0_i32_0 = arith.constant 0 : i32
    %c0_i32_1 = arith.constant 0 : i32
    return %arg0, %c0_i32, %c0_i32_0 : i32, i32, i32
  }
}

module attributes {stable_mosaic.version = 11 : i64} {
  func.func @_bn_relu_kernel(%arg0: i32, %arg1: memref<8x256xbf16, #tpu.memory_space<vmem>>, %arg2: memref<8x1xf32, #tpu.memory_space<vmem>>, %arg3: memref<8x1xf32, #tpu.memory_space<vmem>>, %arg4: memref<8x256xf32, #tpu.memory_space<vmem>>) attributes {dimension_semantics = [#tpu.dimension_semantics<parallel>], iteration_bounds = array<i64: 2>, scalar_prefetch = 0 : i64, scratch_operands = 0 : i64, tpu.core_type = #tpu.core_type<tc>, window_params = [{transform_indices = @transform_0, window_bounds = array<i64: 8, 256>}, {pipeline_mode = #tpu.pipeline_mode<synchronous>, transform_indices = @transform_1, window_bounds = array<i64: 8, 1>}, {pipeline_mode = #tpu.pipeline_mode<synchronous>, transform_indices = @transform_2, window_bounds = array<i64: 8, 1>}, {transform_indices = @transform_3, window_bounds = array<i64: 8, 256>}]} {
    %c0 = arith.constant 0 : index
    %c0_0 = arith.constant 0 : index
    %0 = vector.load %arg1[%c0, %c0_0] : memref<8x256xbf16, #tpu.memory_space<vmem>>, vector<8x256xbf16>
    %1 = arith.extf %0 : vector<8x256xbf16> to vector<8x256xf32>
    %c0_1 = arith.constant 0 : index
    %c0_2 = arith.constant 0 : index
    %2 = vector.load %arg2[%c0_1, %c0_2] : memref<8x1xf32, #tpu.memory_space<vmem>>, vector<8x1xf32>
    %3 = vector.broadcast %2 : vector<8x1xf32> to vector<8x256xf32>
    %4 = arith.mulf %1, %3 : vector<8x256xf32>
    %c0_3 = arith.constant 0 : index
    %c0_4 = arith.constant 0 : index
    %5 = vector.load %arg3[%c0_3, %c0_4] : memref<8x1xf32, #tpu.memory_space<vmem>>, vector<8x1xf32>
    %6 = vector.broadcast %5 : vector<8x1xf32> to vector<8x256xf32>
    %7 = arith.addf %4, %6 : vector<8x256xf32>
    %cst = arith.constant 0.000000e+00 : f32
    %8 = vector.broadcast %cst : f32 to vector<8x256xf32>
    %9 = arith.maximumf %7, %8 : vector<8x256xf32>
    %c0_5 = arith.constant 0 : index
    %c0_6 = arith.constant 0 : index
    %10 = vector.load %arg4[%c0_5, %c0_6] : memref<8x256xf32, #tpu.memory_space<vmem>>, vector<8x256xf32>
    tpu.vector_store %arg4[%c0_5, %c0_6], %9 {strides = array<i32>} : memref<8x256xf32, #tpu.memory_space<vmem>>, vector<8x256xf32>,
    return
  }
  func.func @transform_0(%arg0: i32) -> (i32, i32) {
    %c0_i32 = arith.constant 0 : i32
    %c0_i32_0 = arith.constant 0 : i32
    return %c0_i32, %arg0 : i32, i32
  }
  func.func @transform_1(%arg0: i32) -> (i32, i32) {
    %c0_i32 = arith.constant 0 : i32
    %c0_i32_0 = arith.constant 0 : i32
    %c0_i32_1 = arith.constant 0 : i32
    return %c0_i32, %c0_i32_0 : i32, i32
  }
  func.func @transform_2(%arg0: i32) -> (i32, i32) {
    %c0_i32 = arith.constant 0 : i32
    %c0_i32_0 = arith.constant 0 : i32
    %c0_i32_1 = arith.constant 0 : i32
    return %c0_i32, %c0_i32_0 : i32, i32
  }
  func.func @transform_3(%arg0: i32) -> (i32, i32) {
    %c0_i32 = arith.constant 0 : i32
    %c0_i32_0 = arith.constant 0 : i32
    return %c0_i32, %arg0 : i32, i32
  }
}

</mosaic_0001>

<llo_original>
// kernel: conv_module_forward.3
$region0: #{conv_module_forward.3}
  #allocation0 [shape = 'u32[]', space=smem, size = 0x4, offset = 0x4, fixed_abs, tag = 'smem constant byte address 0x4 - core index']
  #allocation1 [shape = 'u32[144,128]{1,0:T(1,128)}', space=vmem, size = 0x12000, scoped, tag = 'internal scratch']
  %s0 = inlined_call_operand.vmem [shape: bf16[8,512], index: 0, kind: input, shape index: {}]
  %s1 = inlined_call_operand.vmem [shape: f32[8,1], index: 1, kind: input, shape index: {}]
  %s2 = inlined_call_operand.vmem [shape: f32[8,1], index: 2, kind: input, shape index: {}]
  %s3 = inlined_call_operand.vmem [shape: f32[8,512], index: 3, kind: output, shape index: {}]
  %s4 = sld [smem:[#allocation0]]
  $region45: #{conv_module_forward.3} parent=0
    _
  %s6 = ssub.s32 1, %s4
  %s7 = scalar_select 0, %s6, %s4
  loop: start=0, step=1, limit=4
  $region2: #{conv_module_forward.3} parent=0 // loop_pre_header
    _
  $region3: #{conv_module_forward.3} parent=0 // loop_header
    %s9 = sphi 0, %s13
    %p10 = scmp.ge.s32.totalorder %s9, 4
    %s19 = sphi 0, %s21
    %s22 = sphi 0, %s19
    %s23 = sphi 0, %s22
    %s39 = sphi 0, %s23
    %s43 = sphi 0, %s43
    %s45 = sphi 0, %s43
    %s46 = sphi 0, %s45
    %s60 = sphi 0, %s46
    %s64 = sphi 0, %s64
    %s66 = sphi 0, %s64
    %s67 = sphi 0, %s66
    %s81 = sphi 0, %s67
    %s87 = sphi 0, %s89
    %s90 = sphi 0, %s87
    %s91 = sphi 0, %s90
    %s107 = sphi 0, %s91
  $region4: #{conv_module_forward.3} parent=0 // loop_header_branch
    %12 = sbr.rel (%p10) target = $region8
  $region5: #{conv_module_forward.3} parent=0 // loop_body
    %s14 = ssub.s32 %s9, 1
    %s15 = ssub.s32 %s9, 2
    %s16 = sadd.s32 %s9, 1
    %s17 = ssub.s32 %s9, %s16
    %p18 = scmp.eq.s32.totalorder %s17, 0
    %s20 = sadd.s32 %s19, 1
    %s21 = scalar_select %p18, %s19, %s20
    %p24 = pneg %p18
    %p25 = scmp.eq.s32.totalorder %s9, 1
    %p26 = por %p24, %p25
    %p27 = scmp.ne.s32.totalorder %s19, %s22
    %p28 = scmp.eq.s32.totalorder %s9, 0
    %p29 = por %p27, %p28
    %p30 = scmp.ne.s32.totalorder %s19, %s22
    %p31 = scmp.eq.s32.totalorder %s14, 1
    %p32 = por %p30, %p31
    %p33 = scmp.ne.s32.totalorder %s22, %s23
    %p34 = scmp.eq.s32.totalorder %s14, 0
    %p35 = por %p33, %p34
    %p36 = scmp.ne.s32.totalorder %s22, %s23
    %p37 = scmp.eq.s32.totalorder %s15, 1
    %p38 = por %p36, %p37
    %p40 = scmp.ne.s32.totalorder %s23, %s39
    %p41 = scmp.eq.s32.totalorder %s15, 0
    %p42 = por %p40, %p41
    %s44 = sadd.s32 %s43, 1
    %p47 = scmp.eq.s32.totalorder %s9, 1
    %p48 = scmp.ne.s32.totalorder %s43, %s45
    %p49 = scmp.eq.s32.totalorder %s9, 0
    %p50 = por %p48, %p49
    %p51 = scmp.ne.s32.totalorder %s43, %s45
    %p52 = scmp.eq.s32.totalorder %s14, 1
    %p53 = por %p51, %p52
    %p54 = scmp.ne.s32.totalorder %s45, %s46
    %p55 = scmp.eq.s32.totalorder %s14, 0
    %p56 = por %p54, %p55
    %p57 = scmp.ne.s32.totalorder %s45, %s46
    %p58 = scmp.eq.s32.totalorder %s15, 1
    %p59 = por %p57, %p58
    %p61 = scmp.ne.s32.totalorder %s46, %s60
    %p62 = scmp.eq.s32.totalorder %s15, 0
    %p63 = por %p61, %p62
    %s65 = sadd.s32 %s64, 1
    %p68 = scmp.eq.s32.totalorder %s9, 1
    %p69 = scmp.ne.s32.totalorder %s64, %s66
    %p70 = scmp.eq.s32.totalorder %s9, 0
    %p71 = por %p69, %p70
    %p72 = scmp.ne.s32.totalorder %s64, %s66
    %p73 = scmp.eq.s32.totalorder %s14, 1
    %p74 = por %p72, %p73
    %p75 = scmp.ne.s32.totalorder %s66, %s67
    %p76 = scmp.eq.s32.totalorder %s14, 0
    %p77 = por %p75, %p76
    %p78 = scmp.ne.s32.totalorder %s66, %s67
    %p79 = scmp.eq.s32.totalorder %s15, 1
    %p80 = por %p78, %p79
    %p82 = scmp.ne.s32.totalorder %s67, %s81
    %p83 = scmp.eq.s32.totalorder %s15, 0
    %p84 = por %p82, %p83
    %s85 = ssub.s32 %s9, %s16
    %p86 = scmp.eq.s32.totalorder %s85, 0
    %s88 = sadd.s32 %s87, 1
    %s89 = scalar_select %p86, %s87, %s88
    %p92 = pneg %p86
    %p93 = scmp.eq.s32.totalorder %s9, 1
    %p94 = por %p92, %p93
    %p95 = scmp.ne.s32.totalorder %s87, %s90
    %p96 = scmp.eq.s32.totalorder %s9, 0
    %p97 = por %p95, %p96
    %p98 = scmp.ne.s32.totalorder %s87, %s90
    %p99 = scmp.eq.s32.totalorder %s14, 1
    %p100 = por %p98, %p99
    %p101 = scmp.ne.s32.totalorder %s90, %s91
    %p102 = scmp.eq.s32.totalorder %s14, 0
    %p103 = por %p101, %p102
    %p104 = scmp.ne.s32.totalorder %s90, %s91
    %p105 = scmp.eq.s32.totalorder %s15, 1
    %p106 = por %p104, %p105
    %p108 = scmp.ne.s32.totalorder %s91, %s107
    %p109 = scmp.eq.s32.totalorder %s15, 0
    %p110 = por %p108, %p109
    %p111 = scmp.le.s32.totalorder 1, %s9
    %p112 = scmp.lt.s32.totalorder %s9, 3
    %p113 = pnand %p111, %p112
    %p114 = pneg %p113
    // Predicated region
    $region9: #{conv_module_forward.3} parent=5 // pred_check
      _
    $region10: #{conv_module_forward.3} parent=5 // pred_check_branch
      %116 = sbr.rel (%p113) target = $region12
    $region11: #{conv_module_forward.3} parent=5 // pred_region
      %s117 = ssub.s32 %s9, 1
      // Predicated region
      $region13: #{conv_module_forward.3} parent=11 // pred_check
        %p118 = pneg %p56
      $region14: #{conv_module_forward.3} parent=11 // pred_check_branch
        %120 = sbr.rel (%p118) target = $region16
      $region15: #{conv_module_forward.3} parent=11 // pred_region
        _
      $region16: #{conv_module_forward.3} parent=11 // pred_fallthru
        _
      // Predicated region
      $region17: #{conv_module_forward.3} parent=11 // pred_check
        %p121 = pneg %p77
      $region18: #{conv_module_forward.3} parent=11 // pred_check_branch
        %123 = sbr.rel (%p121) target = $region20
      $region19: #{conv_module_forward.3} parent=11 // pred_region
        _
      $region20: #{conv_module_forward.3} parent=11 // pred_fallthru
        _
    $region12: #{conv_module_forward.3} parent=5 // pred_fallthru
      _
    %p124 = scmp.lt.s32.totalorder %s9, 2
    // Predicated region
    $region21: #{conv_module_forward.3} parent=5 // pred_check
      %p125 = pneg %p124
    $region22: #{conv_module_forward.3} parent=5 // pred_check_branch
      %127 = sbr.rel (%p125) target = $region24
    $region23: #{conv_module_forward.3} parent=5 // pred_region
      // Predicated region
      $region25: #{conv_module_forward.3} parent=23 // pred_check
        %p128 = pneg %p29
      $region26: #{conv_module_forward.3} parent=23 // pred_check_branch
        %130 = sbr.rel (%p128) target = $region28
      $region27: #{conv_module_forward.3} parent=23 // pred_region
        %s131 = smul.u32 2, %s9
        %p132 = scmp.lt.s32.totalorder %s131, 3
        %s133 = scalar_select %p132, %s131, 3
        %s134 = smul.addr %s133, 4
        %s135 = scalar_lea.vmem %s0, %s134
        %s136 = smul.u32 2, %s9
      $region28: #{conv_module_forward.3} parent=23 // pred_fallthru
        _
    $region24: #{conv_module_forward.3} parent=5 // pred_fallthru
      _
    %p137 = scmp.le.s32.totalorder 1, %s9
    %p138 = scmp.lt.s32.totalorder %s9, 3
    %p139 = pnand %p137, %p138
    %p140 = pneg %p139
    // Predicated region
    $region29: #{conv_module_forward.3} parent=5 // pred_check
      _
    $region30: #{conv_module_forward.3} parent=5 // pred_check_branch
      %142 = sbr.rel (%p139) target = $region32
    $region31: #{conv_module_forward.3} parent=5 // pred_region
      %s143 = ssub.s32 %s9, 1
      %s144 = smul.u32 2, %s14
      %p145 = scmp.lt.s32.totalorder %s144, 3
      %s146 = scalar_select %p145, %s144, 3
      %s147 = smul.addr %s146, 4
      %s148 = scalar_lea.vmem %s0, %s147
      %p149 = pneg %p35
      %p150 = pneg %p32
      %p151 = pneg %p56
      %p152 = pneg %p53
      %p153 = pneg %p77
      %p154 = pneg %p74
      %p155 = pneg %p103
      %p156 = pneg %p100
      %s157 = smul.u32 2, %s14
      %p158 = scmp.lt.s32.totalorder %s157, 3
      %s159 = scalar_select %p158, %s157, 3
      %s160 = smul.addr %s159, 8
      %s161 = scalar_lea.vmem %s3, %s160
      %s162 = smul.u32 2, %s14
      %p163 = scmp.lt.s32.totalorder %s162, 3
      %s164 = scalar_select %p163, %s162, 3
      %s165 = smul.addr %s164, 4
      %s166 = scalar_lea.vmem %s0, %s165
      %s167 = smul.u32 2, %s14
      %s168 = smul.u32 2, %s14
      %p169 = scmp.lt.s32.totalorder %s168, 3
      %s170 = scalar_select %p169, %s168, 3
      %s171 = smul.addr %s170, 8
      %s172 = scalar_lea.vmem %s3, %s171
      %s173 = smul.u32 2, %s14
      %v174 = vld [vmem:[%s166] sm:$0xff]
      %v175 = vunpack.c.l.bf16 %v174
      %v176 = vunpack.c.h.bf16 %v174
      %v177 = vld [vmem:[%s1] sm:$0xff]
      %179 = vset.pattern.permute.xlu0 0
      %180 = vperm.xlu0 %179, %v177
      %v181 = vpop.permute.xlu0 %180
      %v183 = vmul.f32 %v175, %v181
      %v184 = vmul.f32 %v176, %v181
      %v185 = vld [vmem:[%s2] sm:$0xff]
      %187 = vset.pattern.permute.xlu0 0
      %188 = vperm.xlu0 %187, %v185
      %v189 = vpop.permute.xlu0 %188
      %v191 = vadd.f32 %v183, %v189
      %v192 = vadd.f32 %v184, %v189
      %v193 = vmax.f32 %v191, 0.0
      %v194 = vmax.f32 %v192, 0.0
      %195 = vst [vmem:[%s172] sm:$0xff] %v193
      %196 = vst [vmem:[%s172 + $0x8] sm:$0xff] %v194
      %s197 = smul.u32 2, %s14
      %p198 = scmp.lt.s32.totalorder %s197, 3
      %s199 = scalar_select %p198, %s197, 3
      %s200 = smul.addr %s199, 8
      %s201 = scalar_lea.vmem %s3, %s200
      // Predicated region
      $region33: #{conv_module_forward.3} parent=31 // pred_check
        %p202 = pneg %p100
      $region34: #{conv_module_forward.3} parent=31 // pred_check_branch
        %204 = sbr.rel (%p202) target = $region36
      $region35: #{conv_module_forward.3} parent=31 // pred_region
        %s205 = smul.u32 2, %s14
      $region36: #{conv_module_forward.3} parent=31 // pred_fallthru
        _
    $region32: #{conv_module_forward.3} parent=5 // pred_fallthru
      _
    %p206 = scmp.le.s32.totalorder 2, %s9
    // Predicated region
    $region37: #{conv_module_forward.3} parent=5 // pred_check
      %p207 = pneg %p206
    $region38: #{conv_module_forward.3} parent=5 // pred_check_branch
      %209 = sbr.rel (%p207) target = $region40
    $region39: #{conv_module_forward.3} parent=5 // pred_region
      %s210 = ssub.s32 %s9, 2
      // Predicated region
      $region41: #{conv_module_forward.3} parent=39 // pred_check
        %p211 = pneg %p106
      $region42: #{conv_module_forward.3} parent=39 // pred_check_branch
        %213 = sbr.rel (%p211) target = $region44
      $region43: #{conv_module_forward.3} parent=39 // pred_region
        %s214 = smul.u32 2, %s15
        %p215 = scmp.lt.s32.totalorder %s214, 3
        %s216 = scalar_select %p215, %s214, 3
        %s217 = smul.addr %s216, 8
        %s218 = scalar_lea.vmem %s3, %s217
      $region44: #{conv_module_forward.3} parent=39 // pred_fallthru
        _
    $region40: #{conv_module_forward.3} parent=5 // pred_fallthru
      _
  $region6: #{conv_module_forward.3} parent=0 // loop_footer
    %s13 = sadd.s32 1, %s9
  $region7: #{conv_module_forward.3} parent=0 // loop_footer_branch
    %8 = sbr.rel target = $region3
  $region8: #{conv_module_forward.3} parent=0 // loop_exit
    _

// kernel: conv_module_forward.2
$region0: #{conv_module_forward.2}
  #allocation0 [shape = 'u32[]', space=smem, size = 0x4, offset = 0x4, fixed_abs, tag = 'smem constant byte address 0x4 - core index']
  #allocation1 [shape = 'u32[144,128]{1,0:T(1,128)}', space=vmem, size = 0x12000, scoped, tag = 'internal scratch']
  %s0 = inlined_call_operand.vmem [shape: bf16[2,18,18,4], index: 0, kind: input, shape index: {}]
  %s1 = inlined_call_operand.vmem [shape: bf16[36,8], index: 1, kind: input, shape index: {}]
  %s2 = inlined_call_operand.vmem [shape: bf16[8,512], index: 2, kind: output, shape index: {0}]
  %s3 = inlined_call_operand.vmem [shape: f32[2,1,8], index: 3, kind: output, shape index: {1}]
  %s4 = inlined_call_operand.vmem [shape: f32[2,1,8], index: 4, kind: output, shape index: {2}]
  %5 = xla_tuple %s2, %s3, %s4
  %s6 = sld [smem:[#allocation0]]
  $region57: #{conv_module_forward.2} parent=0
    _
  %s8 = ssub.s32 1, %s6
  %s9 = scalar_select 0, %s8, %s6
  loop: start=0, step=1, limit=4
  $region2: #{conv_module_forward.2} parent=0 // loop_pre_header
    _
  $region3: #{conv_module_forward.2} parent=0 // loop_header
    %s11 = sphi 0, %s15
    %p12 = scmp.ge.s32.totalorder %s11, 4
    %s21 = sphi 0, %s23
    %s24 = sphi 0, %s21
    %s25 = sphi 0, %s24
    %s41 = sphi 0, %s25
    %s45 = sphi 0, %s45
    %s47 = sphi 0, %s45
    %s48 = sphi 0, %s47
    %s62 = sphi 0, %s48
    %s68 = sphi 0, %s70
    %s71 = sphi 0, %s68
    %s72 = sphi 0, %s71
    %s88 = sphi 0, %s72
    %s94 = sphi 0, %s96
    %s97 = sphi 0, %s94
    %s98 = sphi 0, %s97
    %s114 = sphi 0, %s98
    %s120 = sphi 0, %s122
    %s123 = sphi 0, %s120
    %s124 = sphi 0, %s123
    %s140 = sphi 0, %s124
  $region4: #{conv_module_forward.2} parent=0 // loop_header_branch
    %14 = sbr.rel (%p12) target = $region8
  $region5: #{conv_module_forward.2} parent=0 // loop_body
    %s16 = ssub.s32 %s11, 1
    %s17 = ssub.s32 %s11, 2
    %s18 = sadd.s32 %s11, 1
    %s19 = ssub.s32 %s11, %s18
    %p20 = scmp.eq.s32.totalorder %s19, 0
    %s22 = sadd.s32 %s21, 1
    %s23 = scalar_select %p20, %s21, %s22
    %p26 = pneg %p20
    %p27 = scmp.eq.s32.totalorder %s11, 1
    %p28 = por %p26, %p27
    %p29 = scmp.ne.s32.totalorder %s21, %s24
    %p30 = scmp.eq.s32.totalorder %s11, 0
    %p31 = por %p29, %p30
    %p32 = scmp.ne.s32.totalorder %s21, %s24
    %p33 = scmp.eq.s32.totalorder %s16, 1
    %p34 = por %p32, %p33
    %p35 = scmp.ne.s32.totalorder %s24, %s25
    %p36 = scmp.eq.s32.totalorder %s16, 0
    %p37 = por %p35, %p36
    %p38 = scmp.ne.s32.totalorder %s24, %s25
    %p39 = scmp.eq.s32.totalorder %s17, 1
    %p40 = por %p38, %p39
    %p42 = scmp.ne.s32.totalorder %s25, %s41
    %p43 = scmp.eq.s32.totalorder %s17, 0
    %p44 = por %p42, %p43
    %s46 = sadd.s32 %s45, 1
    %p49 = scmp.eq.s32.totalorder %s11, 1
    %p50 = scmp.ne.s32.totalorder %s45, %s47
    %p51 = scmp.eq.s32.totalorder %s11, 0
    %p52 = por %p50, %p51
    %p53 = scmp.ne.s32.totalorder %s45, %s47
    %p54 = scmp.eq.s32.totalorder %s16, 1
    %p55 = por %p53, %p54
    %p56 = scmp.ne.s32.totalorder %s47, %s48
    %p57 = scmp.eq.s32.totalorder %s16, 0
    %p58 = por %p56, %p57
    %p59 = scmp.ne.s32.totalorder %s47, %s48
    %p60 = scmp.eq.s32.totalorder %s17, 1
    %p61 = por %p59, %p60
    %p63 = scmp.ne.s32.totalorder %s48, %s62
    %p64 = scmp.eq.s32.totalorder %s17, 0
    %p65 = por %p63, %p64
    %s66 = ssub.s32 %s11, %s18
    %p67 = scmp.eq.s32.totalorder %s66, 0
    %s69 = sadd.s32 %s68, 1
    %s70 = scalar_select %p67, %s68, %s69
    %p73 = pneg %p67
    %p74 = scmp.eq.s32.totalorder %s11, 1
    %p75 = por %p73, %p74
    %p76 = scmp.ne.s32.totalorder %s68, %s71
    %p77 = scmp.eq.s32.totalorder %s11, 0
    %p78 = por %p76, %p77
    %p79 = scmp.ne.s32.totalorder %s68, %s71
    %p80 = scmp.eq.s32.totalorder %s16, 1
    %p81 = por %p79, %p80
    %p82 = scmp.ne.s32.totalorder %s71, %s72
    %p83 = scmp.eq.s32.totalorder %s16, 0
    %p84 = por %p82, %p83
    %p85 = scmp.ne.s32.totalorder %s71, %s72
    %p86 = scmp.eq.s32.totalorder %s17, 1
    %p87 = por %p85, %p86
    %p89 = scmp.ne.s32.totalorder %s72, %s88
    %p90 = scmp.eq.s32.totalorder %s17, 0
    %p91 = por %p89, %p90
    %s92 = ssub.s32 %s11, %s18
    %p93 = scmp.eq.s32.totalorder %s92, 0
    %s95 = sadd.s32 %s94, 1
    %s96 = scalar_select %p93, %s94, %s95
    %p99 = pneg %p93
    %p100 = scmp.eq.s32.totalorder %s11, 1
    %p101 = por %p99, %p100
    %p102 = scmp.ne.s32.totalorder %s94, %s97
    %p103 = scmp.eq.s32.totalorder %s11, 0
    %p104 = por %p102, %p103
    %p105 = scmp.ne.s32.totalorder %s94, %s97
    %p106 = scmp.eq.s32.totalorder %s16, 1
    %p107 = por %p105, %p106
    %p108 = scmp.ne.s32.totalorder %s97, %s98
    %p109 = scmp.eq.s32.totalorder %s16, 0
    %p110 = por %p108, %p109
    %p111 = scmp.ne.s32.totalorder %s97, %s98
    %p112 = scmp.eq.s32.totalorder %s17, 1
    %p113 = por %p111, %p112
    %p115 = scmp.ne.s32.totalorder %s98, %s114
    %p116 = scmp.eq.s32.totalorder %s17, 0
    %p117 = por %p115, %p116
    %s118 = ssub.s32 %s11, %s18
    %p119 = scmp.eq.s32.totalorder %s118, 0
    %s121 = sadd.s32 %s120, 1
    %s122 = scalar_select %p119, %s120, %s121
    %p125 = pneg %p119
    %p126 = scmp.eq.s32.totalorder %s11, 1
    %p127 = por %p125, %p126
    %p128 = scmp.ne.s32.totalorder %s120, %s123
    %p129 = scmp.eq.s32.totalorder %s11, 0
    %p130 = por %p128, %p129
    %p131 = scmp.ne.s32.totalorder %s120, %s123
    %p132 = scmp.eq.s32.totalorder %s16, 1
    %p133 = por %p131, %p132
    %p134 = scmp.ne.s32.totalorder %s123, %s124
    %p135 = scmp.eq.s32.totalorder %s16, 0
    %p136 = por %p134, %p135
    %p137 = scmp.ne.s32.totalorder %s123, %s124
    %p138 = scmp.eq.s32.totalorder %s17, 1
    %p139 = por %p137, %p138
    %p141 = scmp.ne.s32.totalorder %s124, %s140
    %p142 = scmp.eq.s32.totalorder %s17, 0
    %p143 = por %p141, %p142
    %p144 = scmp.le.s32.totalorder 1, %s11
    %p145 = scmp.lt.s32.totalorder %s11, 3
    %p146 = pnand %p144, %p145
    %p147 = pneg %p146
    // Predicated region
    $region9: #{conv_module_forward.2} parent=5 // pred_check
      _
    $region10: #{conv_module_forward.2} parent=5 // pred_check_branch
      %149 = sbr.rel (%p146) target = $region12
    $region11: #{conv_module_forward.2} parent=5 // pred_region
      %s150 = ssub.s32 %s11, 1
      // Predicated region
      $region13: #{conv_module_forward.2} parent=11 // pred_check
        %p151 = pneg %p58
      $region14: #{conv_module_forward.2} parent=11 // pred_check_branch
        %153 = sbr.rel (%p151) target = $region16
      $region15: #{conv_module_forward.2} parent=11 // pred_region
        _
      $region16: #{conv_module_forward.2} parent=11 // pred_fallthru
        _
    $region12: #{conv_module_forward.2} parent=5 // pred_fallthru
      _
    %p154 = scmp.lt.s32.totalorder %s11, 2
    // Predicated region
    $region17: #{conv_module_forward.2} parent=5 // pred_check
      %p155 = pneg %p154
    $region18: #{conv_module_forward.2} parent=5 // pred_check_branch
      %157 = sbr.rel (%p155) target = $region20
    $region19: #{conv_module_forward.2} parent=5 // pred_region
      // Predicated region
      $region21: #{conv_module_forward.2} parent=19 // pred_check
        %p158 = pneg %p31
      $region22: #{conv_module_forward.2} parent=19 // pred_check_branch
        %160 = sbr.rel (%p158) target = $region24
      $region23: #{conv_module_forward.2} parent=19 // pred_region
        %p161 = scmp.lt.s32.totalorder %s11, 1
        %s162 = scalar_select %p161, %s11, 1
        %s163 = smul.addr %s162, 54
        %s164 = smul.addr %s163, 4
        %s165 = scalar_lea.vmem %s0, %s164
      $region24: #{conv_module_forward.2} parent=19 // pred_fallthru
        _
    $region20: #{conv_module_forward.2} parent=5 // pred_fallthru
      _
    %p166 = scmp.le.s32.totalorder 1, %s11
    %p167 = scmp.lt.s32.totalorder %s11, 3
    %p168 = pnand %p166, %p167
    %p169 = pneg %p168
    // Predicated region
    $region25: #{conv_module_forward.2} parent=5 // pred_check
      _
    $region26: #{conv_module_forward.2} parent=5 // pred_check_branch
      %171 = sbr.rel (%p168) target = $region28
    $region27: #{conv_module_forward.2} parent=5 // pred_region
      %s172 = ssub.s32 %s11, 1
      %p173 = scmp.lt.s32.totalorder %s16, 1
      %s174 = scalar_select %p173, %s16, 1
      %s175 = smul.addr %s174, 54
      %s176 = smul.addr %s175, 4
      %s177 = scalar_lea.vmem %s0, %s176
      %p178 = pneg %p37
      %p179 = pneg %p34
      %p180 = pneg %p58
      %p181 = pneg %p55
      %p182 = pneg %p84
      %p183 = pneg %p81
      %s184 = smul.u32 2, %s16
      %p185 = scmp.lt.s32.totalorder %s184, 3
      %s186 = scalar_select %p185, %s184, 3
      %s187 = smul.addr %s186, 4
      %s188 = scalar_lea.vmem %s2, %s187
      %p189 = pneg %p110
      %p190 = pneg %p107
      %p191 = scmp.lt.s32.totalorder %s16, 1
      %s192 = scalar_select %p191, %s16, 1
      %s193 = scalar_lea.vmem %s3, %s192
      %p194 = pneg %p136
      %p195 = pneg %p133
      %p196 = scmp.lt.s32.totalorder %s16, 1
      %s197 = scalar_select %p196, %s16, 1
      %s198 = scalar_lea.vmem %s4, %s197
      %p199 = scmp.lt.s32.totalorder %s16, 1
      %s200 = scalar_select %p199, %s16, 1
      %s201 = smul.addr %s200, 54
      %s202 = smul.addr %s201, 4
      %s203 = scalar_lea.vmem %s0, %s202
      %s204 = smul.u32 2, %s16
      %p205 = scmp.lt.s32.totalorder %s204, 3
      %s206 = scalar_select %p205, %s204, 3
      %s207 = smul.addr %s206, 4
      %s208 = scalar_lea.vmem %s2, %s207
      %s209 = smul.u32 2, %s16
      %p210 = scmp.lt.s32.totalorder %s16, 1
      %s211 = scalar_select %p210, %s16, 1
      %s212 = scalar_lea.vmem %s3, %s211
      %p213 = scmp.lt.s32.totalorder %s16, 1
      %s214 = scalar_select %p213, %s16, 1
      %s215 = scalar_lea.vmem %s4, %s214
      %v217 = vld [vmem:[%s203] sm:$0xf]
      %v218 = vld [vmem:[%s203 + $0x4] sm:$0xf]
      %v219 = vld [vmem:[%s203 + $0xc] sm:$0xf]
      %v220 = vld [vmem:[%s203 + $0x10] sm:$0xf]
      %v221 = vld [vmem:[%s203 + $0x18] sm:$0xf]
      %v222 = vld [vmem:[%s203 + $0x1c] sm:$0xf]
      %v223 = vld [vmem:[%s203 + $0x24] sm:$0xf]
      %v224 = vld [vmem:[%s203 + $0x28] sm:$0xf]
      %v225 = vld [vmem:[%s203 + $0x30] sm:$0xf]
      %v226 = vld [vmem:[%s203 + $0x34] sm:$0xf]
      %v227 = vld [vmem:[%s203 + $0x3c] sm:$0xf]
      %v228 = vld [vmem:[%s203 + $0x40] sm:$0xf]
      %v229 = vld [vmem:[%s203 + $0x48] sm:$0xf]
      %v230 = vld [vmem:[%s203 + $0x4c] sm:$0xf]
      %v231 = vld [vmem:[%s203 + $0x54] sm:$0xf]
      %v232 = vld [vmem:[%s203 + $0x58] sm:$0xf]
      %v233 = vld [vmem:[%s203 + $0x60] sm:$0xf]
      %v234 = vld [vmem:[%s203 + $0x64] sm:$0xf]
      %v235 = vld [vmem:[%s203 + $0x6c] sm:$0xf]
      %v236 = vld [vmem:[%s203 + $0x70] sm:$0xf]
      %v237 = vld [vmem:[%s203 + $0x78] sm:$0xf]
      %v238 = vld [vmem:[%s203 + $0x7c] sm:$0xf]
      %v239 = vld [vmem:[%s203 + $0x84] sm:$0xf]
      %v240 = vld [vmem:[%s203 + $0x88] sm:$0xf]
      %v241 = vld [vmem:[%s203 + $0x90] sm:$0xf]
      %v242 = vld [vmem:[%s203 + $0x94] sm:$0xf]
      %v243 = vld [vmem:[%s203 + $0x9c] sm:$0xf]
      %v244 = vld [vmem:[%s203 + $0xa0] sm:$0xf]
      %v245 = vld [vmem:[%s203 + $0xa8] sm:$0xf]
      %v246 = vld [vmem:[%s203 + $0xac] sm:$0xf]
      %v247 = vld [vmem:[%s203 + $0xb4] sm:$0xf]
      %v248 = vld [vmem:[%s203 + $0xb8] sm:$0xf]
      %v249 = vld [vmem:[%s203 + $0x8] sm:$0x1]
      %v250 = vld [vmem:[%s203 + $0x14] sm:$0x1]
      %v251 = vld [vmem:[%s203 + $0x20] sm:$0x1]
      %v252 = vld [vmem:[%s203 + $0x2c] sm:$0x1]
      %v253 = vld [vmem:[%s203 + $0x38] sm:$0x1]
      %v254 = vld [vmem:[%s203 + $0x44] sm:$0x1]
      %v255 = vld [vmem:[%s203 + $0x50] sm:$0x1]
      %v256 = vld [vmem:[%s203 + $0x5c] sm:$0x1]
      %v257 = vld [vmem:[%s203 + $0x68] sm:$0x1]
      %v258 = vld [vmem:[%s203 + $0x74] sm:$0x1]
      %v259 = vld [vmem:[%s203 + $0x80] sm:$0x1]
      %v260 = vld [vmem:[%s203 + $0x8c] sm:$0x1]
      %v261 = vld [vmem:[%s203 + $0x98] sm:$0x1]
      %v262 = vld [vmem:[%s203 + $0xa4] sm:$0x1]
      %v263 = vld [vmem:[%s203 + $0xb0] sm:$0x1]
      %v264 = vld [vmem:[%s203 + $0xbc] sm:$0x1]
      %v265 = vld [vmem:[%s203] sm:$0xe]
      %v266 = vld [vmem:[%s203 + $0xc] sm:$0xe]
      %v267 = vld [vmem:[%s203 + $0x18] sm:$0xe]
      %v268 = vld [vmem:[%s203 + $0x24] sm:$0xe]
      %v269 = vld [vmem:[%s203 + $0x30] sm:$0xe]
      %v270 = vld [vmem:[%s203 + $0x3c] sm:$0xe]
      %v271 = vld [vmem:[%s203 + $0x48] sm:$0xe]
      %v272 = vld [vmem:[%s203 + $0x54] sm:$0xe]
      %v273 = vld [vmem:[%s203 + $0x60] sm:$0xe]
      %v274 = vld [vmem:[%s203 + $0x6c] sm:$0xe]
      %v275 = vld [vmem:[%s203 + $0x78] sm:$0xe]
      %v276 = vld [vmem:[%s203 + $0x84] sm:$0xe]
      %v277 = vld [vmem:[%s203 + $0x90] sm:$0xe]
      %v278 = vld [vmem:[%s203 + $0x9c] sm:$0xe]
      %v279 = vld [vmem:[%s203 + $0xa8] sm:$0xe]
      %v280 = vld [vmem:[%s203 + $0xb4] sm:$0xe]
      %s281 = scalar_lea.vmem %s203, 12
      %v282 = vld [vmem:[%s281] sm:$0xf]
      %v283 = vld [vmem:[%s281 + $0x4] sm:$0xf]
      %v284 = vld [vmem:[%s281 + $0xc] sm:$0xf]
      %v285 = vld [vmem:[%s281 + $0x10] sm:$0xf]
      %v286 = vld [vmem:[%s281 + $0x18] sm:$0xf]
      %v287 = vld [vmem:[%s281 + $0x1c] sm:$0xf]
      %v288 = vld [vmem:[%s281 + $0x24] sm:$0xf]
      %v289 = vld [vmem:[%s281 + $0x28] sm:$0xf]
      %v290 = vld [vmem:[%s281 + $0x30] sm:$0xf]
      %v291 = vld [vmem:[%s281 + $0x34] sm:$0xf]
      %v292 = vld [vmem:[%s281 + $0x3c] sm:$0xf]
      %v293 = vld [vmem:[%s281 + $0x40] sm:$0xf]
      %v294 = vld [vmem:[%s281 + $0x48] sm:$0xf]
      %v295 = vld [vmem:[%s281 + $0x4c] sm:$0xf]
      %v296 = vld [vmem:[%s281 + $0x54] sm:$0xf]
      %v297 = vld [vmem:[%s281 + $0x58] sm:$0xf]
      %v298 = vld [vmem:[%s281 + $0x60] sm:$0xf]
      %v299 = vld [vmem:[%s281 + $0x64] sm:$0xf]
      %v300 = vld [vmem:[%s281 + $0x6c] sm:$0xf]
      %v301 = vld [vmem:[%s281 + $0x70] sm:$0xf]
      %v302 = vld [vmem:[%s281 + $0x78] sm:$0xf]
      %v303 = vld [vmem:[%s281 + $0x7c] sm:$0xf]
      %v304 = vld [vmem:[%s281 + $0x84] sm:$0xf]
      %v305 = vld [vmem:[%s281 + $0x88] sm:$0xf]
      %v306 = vld [vmem:[%s281 + $0x90] sm:$0xf]
      %v307 = vld [vmem:[%s281 + $0x94] sm:$0xf]
      %v308 = vld [vmem:[%s281 + $0x9c] sm:$0xf]
      %v309 = vld [vmem:[%s281 + $0xa0] sm:$0xf]
      %v310 = vld [vmem:[%s281 + $0xa8] sm:$0xf]
      %v311 = vld [vmem:[%s281 + $0xac] sm:$0xf]
      %v312 = vld [vmem:[%s281 + $0xb4] sm:$0xf]
      %v313 = vld [vmem:[%s281 + $0xb8] sm:$0xf]
      %v314 = vld [vmem:[%s281 + $0x8] sm:$0x1]
      %v315 = vld [vmem:[%s281 + $0x14] sm:$0x1]
      %v316 = vld [vmem:[%s281 + $0x20] sm:$0x1]
      %v317 = vld [vmem:[%s281 + $0x2c] sm:$0x1]
      %v318 = vld [vmem:[%s281 + $0x38] sm:$0x1]
      %v319 = vld [vmem:[%s281 + $0x44] sm:$0x1]
      %v320 = vld [vmem:[%s281 + $0x50] sm:$0x1]
      %v321 = vld [vmem:[%s281 + $0x5c] sm:$0x1]
      %v322 = vld [vmem:[%s281 + $0x68] sm:$0x1]
      %v323 = vld [vmem:[%s281 + $0x74] sm:$0x1]
      %v324 = vld [vmem:[%s281 + $0x80] sm:$0x1]
      %v325 = vld [vmem:[%s281 + $0x8c] sm:$0x1]
      %v326 = vld [vmem:[%s281 + $0x98] sm:$0x1]
      %v327 = vld [vmem:[%s281 + $0xa4] sm:$0x1]
      %v328 = vld [vmem:[%s281 + $0xb0] sm:$0x1]
      %v329 = vld [vmem:[%s281 + $0xbc] sm:$0x1]
      %v330 = vld [vmem:[%s281] sm:$0xe]
      %v331 = vld [vmem:[%s281 + $0xc] sm:$0xe]
      %v332 = vld [vmem:[%s281 + $0x18] sm:$0xe]
      %v333 = vld [vmem:[%s281 + $0x24] sm:$0xe]
      %v334 = vld [vmem:[%s281 + $0x30] sm:$0xe]
      %v335 = vld [vmem:[%s281 + $0x3c] sm:$0xe]
      %v336 = vld [vmem:[%s281 + $0x48] sm:$0xe]
      %v337 = vld [vmem:[%s281 + $0x54] sm:$0xe]
      %v338 = vld [vmem:[%s281 + $0x60] sm:$0xe]
      %v339 = vld [vmem:[%s281 + $0x6c] sm:$0xe]
      %v340 = vld [vmem:[%s281 + $0x78] sm:$0xe]
      %v341 = vld [vmem:[%s281 + $0x84] sm:$0xe]
      %v342 = vld [vmem:[%s281 + $0x90] sm:$0xe]
      %v343 = vld [vmem:[%s281 + $0x9c] sm:$0xe]
      %v344 = vld [vmem:[%s281 + $0xa8] sm:$0xe]
      %v345 = vld [vmem:[%s281 + $0xb4] sm:$0xe]
      %s346 = scalar_lea.vmem %s203, 24
      %v347 = vld [vmem:[%s346] sm:$0xf]
      %v348 = vld [vmem:[%s346 + $0x4] sm:$0xf]
      %v349 = vld [vmem:[%s346 + $0xc] sm:$0xf]
      %v350 = vld [vmem:[%s346 + $0x10] sm:$0xf]
      %v351 = vld [vmem:[%s346 + $0x18] sm:$0xf]
      %v352 = vld [vmem:[%s346 + $0x1c] sm:$0xf]
      %v353 = vld [vmem:[%s346 + $0x24] sm:$0xf]
      %v354 = vld [vmem:[%s346 + $0x28] sm:$0xf]
      %v355 = vld [vmem:[%s346 + $0x30] sm:$0xf]
      %v356 = vld [vmem:[%s346 + $0x34] sm:$0xf]
      %v357 = vld [vmem:[%s346 + $0x3c] sm:$0xf]
      %v358 = vld [vmem:[%s346 + $0x40] sm:$0xf]
      %v359 = vld [vmem:[%s346 + $0x48] sm:$0xf]
      %v360 = vld [vmem:[%s346 + $0x4c] sm:$0xf]
      %v361 = vld [vmem:[%s346 + $0x54] sm:$0xf]
      %v362 = vld [vmem:[%s346 + $0x58] sm:$0xf]
      %v363 = vld [vmem:[%s346 + $0x60] sm:$0xf]
      %v364 = vld [vmem:[%s346 + $0x64] sm:$0xf]
      %v365 = vld [vmem:[%s346 + $0x6c] sm:$0xf]
      %v366 = vld [vmem:[%s346 + $0x70] sm:$0xf]
      %v367 = vld [vmem:[%s346 + $0x78] sm:$0xf]
      %v368 = vld [vmem:[%s346 + $0x7c] sm:$0xf]
      %v369 = vld [vmem:[%s346 + $0x84] sm:$0xf]
      %v370 = vld [vmem:[%s346 + $0x88] sm:$0xf]
      %v371 = vld [vmem:[%s346 + $0x90] sm:$0xf]
      %v372 = vld [vmem:[%s346 + $0x94] sm:$0xf]
      %v373 = vld [vmem:[%s346 + $0x9c] sm:$0xf]
      %v374 = vld [vmem:[%s346 + $0xa0] sm:$0xf]
      %v375 = vld [vmem:[%s346 + $0xa8] sm:$0xf]
      %v376 = vld [vmem:[%s346 + $0xac] sm:$0xf]
      %v377 = vld [vmem:[%s346 + $0xb4] sm:$0xf]
      %v378 = vld [vmem:[%s346 + $0xb8] sm:$0xf]
      %v379 = vld [vmem:[%s346 + $0x8] sm:$0x1]
      %v380 = vld [vmem:[%s346 + $0x14] sm:$0x1]
      %v381 = vld [vmem:[%s346 + $0x20] sm:$0x1]
      %v382 = vld [vmem:[%s346 + $0x2c] sm:$0x1]
      %v383 = vld [vmem:[%s346 + $0x38] sm:$0x1]
      %v384 = vld [vmem:[%s346 + $0x44] sm:$0x1]
      %v385 = vld [vmem:[%s346 + $0x50] sm:$0x1]
      %v386 = vld [vmem:[%s346 + $0x5c] sm:$0x1]
      %v387 = vld [vmem:[%s346 + $0x68] sm:$0x1]
      %v388 = vld [vmem:[%s346 + $0x74] sm:$0x1]
      %v389 = vld [vmem:[%s346 + $0x80] sm:$0x1]
      %v390 = vld [vmem:[%s346 + $0x8c] sm:$0x1]
      %v391 = vld [vmem:[%s346 + $0x98] sm:$0x1]
      %v392 = vld [vmem:[%s346 + $0xa4] sm:$0x1]
      %v393 = vld [vmem:[%s346 + $0xb0] sm:$0x1]
      %v394 = vld [vmem:[%s346 + $0xbc] sm:$0x1]
      %v395 = vld [vmem:[%s346] sm:$0xe]
      %v396 = vld [vmem:[%s346 + $0xc] sm:$0xe]
      %v397 = vld [vmem:[%s346 + $0x18] sm:$0xe]
      %v398 = vld [vmem:[%s346 + $0x24] sm:$0xe]
      %v399 = vld [vmem:[%s346 + $0x30] sm:$0xe]
      %v400 = vld [vmem:[%s346 + $0x3c] sm:$0xe]
      %v401 = vld [vmem:[%s346 + $0x48] sm:$0xe]
      %v402 = vld [vmem:[%s346 + $0x54] sm:$0xe]
      %v403 = vld [vmem:[%s346 + $0x60] sm:$0xe]
      %v404 = vld [vmem:[%s346 + $0x6c] sm:$0xe]
      %v405 = vld [vmem:[%s346 + $0x78] sm:$0xe]
      %v406 = vld [vmem:[%s346 + $0x84] sm:$0xe]
      %v407 = vld [vmem:[%s346 + $0x90] sm:$0xe]
      %v408 = vld [vmem:[%s346 + $0x9c] sm:$0xe]
      %v409 = vld [vmem:[%s346 + $0xa8] sm:$0xe]
      %v410 = vld [vmem:[%s346 + $0xb4] sm:$0xe]
      %v443 = vunpack.c.l.b16 %v217
      %v444 = vunpack.c.l.b16 %v218
      %v445 = vunpack.c.l.b16 %v219
      %v446 = vunpack.c.l.b16 %v220
      %v447 = vunpack.c.l.b16 %v221
      %v448 = vunpack.c.l.b16 %v222
      %v449 = vunpack.c.l.b16 %v223
      %v450 = vunpack.c.l.b16 %v224
      %v451 = vunpack.c.l.b16 %v225
      %v452 = vunpack.c.l.b16 %v226
      %v453 = vunpack.c.l.b16 %v227
      %v454 = vunpack.c.l.b16 %v228
      %v455 = vunpack.c.l.b16 %v229
      %v456 = vunpack.c.l.b16 %v230
      %v457 = vunpack.c.l.b16 %v231
      %v458 = vunpack.c.l.b16 %v232
      %v459 = vunpack.c.l.b16 %v233
      %v460 = vunpack.c.l.b16 %v234
      %v461 = vunpack.c.l.b16 %v235
      %v462 = vunpack.c.l.b16 %v236
      %v463 = vunpack.c.l.b16 %v237
      %v464 = vunpack.c.l.b16 %v238
      %v465 = vunpack.c.l.b16 %v239
      %v466 = vunpack.c.l.b16 %v240
      %v467 = vunpack.c.l.b16 %v241
      %v468 = vunpack.c.l.b16 %v242
      %v469 = vunpack.c.l.b16 %v243
      %v470 = vunpack.c.l.b16 %v244
      %v471 = vunpack.c.l.b16 %v245
      %v472 = vunpack.c.l.b16 %v246
      %v473 = vunpack.c.l.b16 %v247
      %v474 = vunpack.c.l.b16 %v248
      %v475 = vpack.c.b16 %v444, %v443
      %v476 = vpack.c.b16 %v446, %v445
      %v477 = vpack.c.b16 %v448, %v447
      %v478 = vpack.c.b16 %v450, %v449
      %v479 = vpack.c.b16 %v452, %v451
      %v480 = vpack.c.b16 %v454, %v453
      %v481 = vpack.c.b16 %v456, %v455
      %v482 = vpack.c.b16 %v458, %v457
      %v483 = vpack.c.b16 %v460, %v459
      %v484 = vpack.c.b16 %v462, %v461
      %v485 = vpack.c.b16 %v464, %v463
      %v486 = vpack.c.b16 %v466, %v465
      %v487 = vpack.c.b16 %v468, %v467
      %v488 = vpack.c.b16 %v470, %v469
      %v489 = vpack.c.b16 %v472, %v471
      %v490 = vpack.c.b16 %v474, %v473
      %v507 = vunpack.c.l.b16 %v249
      %v508 = vunpack.c.l.b16 %v250
      %v509 = vunpack.c.l.b16 %v251
      %v510 = vunpack.c.l.b16 %v252
      %v511 = vunpack.c.l.b16 %v253
      %v512 = vunpack.c.l.b16 %v254
      %v513 = vunpack.c.l.b16 %v255
      %v514 = vunpack.c.l.b16 %v256
      %v515 = vunpack.c.l.b16 %v257
      %v516 = vunpack.c.l.b16 %v258
      %v517 = vunpack.c.l.b16 %v259
      %v518 = vunpack.c.l.b16 %v260
      %v519 = vunpack.c.l.b16 %v261
      %v520 = vunpack.c.l.b16 %v262
      %v521 = vunpack.c.l.b16 %v263
      %v522 = vunpack.c.l.b16 %v264
      %v523 = vpack.c.b16 %v507, %v507
      %v524 = vpack.c.b16 %v508, %v508
      %v525 = vpack.c.b16 %v509, %v509
      %v526 = vpack.c.b16 %v510, %v510
      %v527 = vpack.c.b16 %v511, %v511
      %v528 = vpack.c.b16 %v512, %v512
      %v529 = vpack.c.b16 %v513, %v513
      %v530 = vpack.c.b16 %v514, %v514
      %v531 = vpack.c.b16 %v515, %v515
      %v532 = vpack.c.b16 %v516, %v516
      %v533 = vpack.c.b16 %v517, %v517
      %v534 = vpack.c.b16 %v518, %v518
      %v535 = vpack.c.b16 %v519, %v519
      %v536 = vpack.c.b16 %v520, %v520
      %v537 = vpack.c.b16 %v521, %v521
      %v538 = vpack.c.b16 %v522, %v522
      %vm539 = vsmask.f32 7424
      %v541 = vshrl.u32 %v475, 16
      %v543 = vshll.u32 %v475, 16
      %v545 = vrot.slane %v543, 1
      %v546 = vor.u32 %v541, %v545
      %v548 = vshll.u32 %v523, 16
      %v550 = vrot.slane %v548, 1
      %v551 = vsel %vm539, %v546, %v550
      %v553 = vshrl.u32 %v476, 16
      %v555 = vshll.u32 %v476, 16
      %v557 = vrot.slane %v555, 1
      %v558 = vor.u32 %v553, %v557
      %v560 = vshll.u32 %v524, 16
      %v562 = vrot.slane %v560, 1
      %v563 = vsel %vm539, %v558, %v562
      %v565 = vshrl.u32 %v477, 16
      %v567 = vshll.u32 %v477, 16
      %v569 = vrot.slane %v567, 1
      %v570 = vor.u32 %v565, %v569
      %v572 = vshll.u32 %v525, 16
      %v574 = vrot.slane %v572, 1
      %v575 = vsel %vm539, %v570, %v574
      %v577 = vshrl.u32 %v478, 16
      %v579 = vshll.u32 %v478, 16
      %v581 = vrot.slane %v579, 1
      %v582 = vor.u32 %v577, %v581
      %v584 = vshll.u32 %v526, 16
      %v586 = vrot.slane %v584, 1
      %v587 = vsel %vm539, %v582, %v586
      %v589 = vshrl.u32 %v479, 16
      %v591 = vshll.u32 %v479, 16
      %v593 = vrot.slane %v591, 1
      %v594 = vor.u32 %v589, %v593
      %v596 = vshll.u32 %v527, 16
      %v598 = vrot.slane %v596, 1
      %v599 = vsel %vm539, %v594, %v598
      %v601 = vshrl.u32 %v480, 16
      %v603 = vshll.u32 %v480, 16
      %v605 = vrot.slane %v603, 1
      %v606 = vor.u32 %v601, %v605
      %v608 = vshll.u32 %v528, 16
      %v610 = vrot.slane %v608, 1
      %v611 = vsel %vm539, %v606, %v610
      %v613 = vshrl.u32 %v481, 16
      %v615 = vshll.u32 %v481, 16
      %v617 = vrot.slane %v615, 1
      %v618 = vor.u32 %v613, %v617
      %v620 = vshll.u32 %v529, 16
      %v622 = vrot.slane %v620, 1
      %v623 = vsel %vm539, %v618, %v622
      %v625 = vshrl.u32 %v482, 16
      %v627 = vshll.u32 %v482, 16
      %v629 = vrot.slane %v627, 1
      %v630 = vor.u32 %v625, %v629
      %v632 = vshll.u32 %v530, 16
      %v634 = vrot.slane %v632, 1
      %v635 = vsel %vm539, %v630, %v634
      %v637 = vshrl.u32 %v483, 16
      %v639 = vshll.u32 %v483, 16
      %v641 = vrot.slane %v639, 1
      %v642 = vor.u32 %v637, %v641
      %v644 = vshll.u32 %v531, 16
      %v646 = vrot.slane %v644, 1
      %v647 = vsel %vm539, %v642, %v646
      %v649 = vshrl.u32 %v484, 16
      %v651 = vshll.u32 %v484, 16
      %v653 = vrot.slane %v651, 1
      %v654 = vor.u32 %v649, %v653
      %v656 = vshll.u32 %v532, 16
      %v658 = vrot.slane %v656, 1
      %v659 = vsel %vm539, %v654, %v658
      %v661 = vshrl.u32 %v485, 16
      %v663 = vshll.u32 %v485, 16
      %v665 = vrot.slane %v663, 1
      %v666 = vor.u32 %v661, %v665
      %v668 = vshll.u32 %v533, 16
      %v670 = vrot.slane %v668, 1
      %v671 = vsel %vm539, %v666, %v670
      %v673 = vshrl.u32 %v486, 16
      %v675 = vshll.u32 %v486, 16
      %v677 = vrot.slane %v675, 1
      %v678 = vor.u32 %v673, %v677
      %v680 = vshll.u32 %v534, 16
      %v682 = vrot.slane %v680, 1
      %v683 = vsel %vm539, %v678, %v682
      %v685 = vshrl.u32 %v487, 16
      %v687 = vshll.u32 %v487, 16
      %v689 = vrot.slane %v687, 1
      %v690 = vor.u32 %v685, %v689
      %v692 = vshll.u32 %v535, 16
      %v694 = vrot.slane %v692, 1
      %v695 = vsel %vm539, %v690, %v694
      %v697 = vshrl.u32 %v488, 16
      %v699 = vshll.u32 %v488, 16
      %v701 = vrot.slane %v699, 1
      %v702 = vor.u32 %v697, %v701
      %v704 = vshll.u32 %v536, 16
      %v706 = vrot.slane %v704, 1
      %v707 = vsel %vm539, %v702, %v706
      %v709 = vshrl.u32 %v489, 16
      %v711 = vshll.u32 %v489, 16
      %v713 = vrot.slane %v711, 1
      %v714 = vor.u32 %v709, %v713
      %v716 = vshll.u32 %v537, 16
      %v718 = vrot.slane %v716, 1
      %v719 = vsel %vm539, %v714, %v718
      %v721 = vshrl.u32 %v490, 16
      %v723 = vshll.u32 %v490, 16
      %v725 = vrot.slane %v723, 1
      %v726 = vor.u32 %v721, %v725
      %v728 = vshll.u32 %v538, 16
      %v730 = vrot.slane %v728, 1
      %v731 = vsel %vm539, %v726, %v730
      %732 = vrot.lane.b32.xlu0 %v551, 4
      %v733 = vpop.permute.xlu0 %732
      %734 = vrot.lane.b32.xlu0 %v563, 4
      %v735 = vpop.permute.xlu0 %734
      %736 = vrot.lane.b32.xlu0 %v575, 4
      %v737 = vpop.permute.xlu0 %736
      %738 = vrot.lane.b32.xlu0 %v587, 4
      %v739 = vpop.permute.xlu0 %738
      %740 = vrot.lane.b32.xlu0 %v599, 4
      %v741 = vpop.permute.xlu0 %740
      %742 = vrot.lane.b32.xlu0 %v611, 4
      %v743 = vpop.permute.xlu0 %742
      %744 = vrot.lane.b32.xlu0 %v623, 4
      %v745 = vpop.permute.xlu0 %744
      %746 = vrot.lane.b32.xlu0 %v635, 4
      %v747 = vpop.permute.xlu0 %746
      %748 = vrot.lane.b32.xlu0 %v647, 4
      %v749 = vpop.permute.xlu0 %748
      %750 = vrot.lane.b32.xlu0 %v659, 4
      %v751 = vpop.permute.xlu0 %750
      %752 = vrot.lane.b32.xlu0 %v671, 4
      %v753 = vpop.permute.xlu0 %752
      %754 = vrot.lane.b32.xlu0 %v683, 4
      %v755 = vpop.permute.xlu0 %754
      %756 = vrot.lane.b32.xlu0 %v695, 4
      %v757 = vpop.permute.xlu0 %756
      %758 = vrot.lane.b32.xlu0 %v707, 4
      %v759 = vpop.permute.xlu0 %758
      %760 = vrot.lane.b32.xlu0 %v719, 4
      %v761 = vpop.permute.xlu0 %760
      %762 = vrot.lane.b32.xlu0 %v731, 4
      %v763 = vpop.permute.xlu0 %762
      %v780 = vunpack.c.l.b16 %v265
      %v781 = vunpack.c.l.b16 %v266
      %v782 = vunpack.c.l.b16 %v267
      %v783 = vunpack.c.l.b16 %v268
      %v784 = vunpack.c.l.b16 %v269
      %v785 = vunpack.c.l.b16 %v270
      %v786 = vunpack.c.l.b16 %v271
      %v787 = vunpack.c.l.b16 %v272
      %v788 = vunpack.c.l.b16 %v273
      %v789 = vunpack.c.l.b16 %v274
      %v790 = vunpack.c.l.b16 %v275
      %v791 = vunpack.c.l.b16 %v276
      %v792 = vunpack.c.l.b16 %v277
      %v793 = vunpack.c.l.b16 %v278
      %v794 = vunpack.c.l.b16 %v279
      %v795 = vunpack.c.l.b16 %v280
      %v796 = vpack.c.b16 %v444, %v780
      %v797 = vpack.c.b16 %v446, %v781
      %v798 = vpack.c.b16 %v448, %v782
      %v799 = vpack.c.b16 %v450, %v783
      %v800 = vpack.c.b16 %v452, %v784
      %v801 = vpack.c.b16 %v454, %v785
      %v802 = vpack.c.b16 %v456, %v786
      %v803 = vpack.c.b16 %v458, %v787
      %v804 = vpack.c.b16 %v460, %v788
      %v805 = vpack.c.b16 %v462, %v789
      %v806 = vpack.c.b16 %v464, %v790
      %v807 = vpack.c.b16 %v466, %v791
      %v808 = vpack.c.b16 %v468, %v792
      %v809 = vpack.c.b16 %v470, %v793
      %v810 = vpack.c.b16 %v472, %v794
      %v811 = vpack.c.b16 %v474, %v795
      %vm812 = vcmask 1046528
      %v813 = vrot.slane %v796, 1
      %v814 = vrot.slane %v523, 1
      %v815 = vsel %vm812, %v813, %v814
      %v816 = vrot.slane %v797, 1
      %v817 = vrot.slane %v524, 1
      %v818 = vsel %vm812, %v816, %v817
      %v819 = vrot.slane %v798, 1
      %v820 = vrot.slane %v525, 1
      %v821 = vsel %vm812, %v819, %v820
      %v822 = vrot.slane %v799, 1
      %v823 = vrot.slane %v526, 1
      %v824 = vsel %vm812, %v822, %v823
      %v825 = vrot.slane %v800, 1
      %v826 = vrot.slane %v527, 1
      %v827 = vsel %vm812, %v825, %v826
      %v828 = vrot.slane %v801, 1
      %v829 = vrot.slane %v528, 1
      %v830 = vsel %vm812, %v828, %v829
      %v831 = vrot.slane %v802, 1
      %v832 = vrot.slane %v529, 1
      %v833 = vsel %vm812, %v831, %v832
      %v834 = vrot.slane %v803, 1
      %v835 = vrot.slane %v530, 1
      %v836 = vsel %vm812, %v834, %v835
      %v837 = vrot.slane %v804, 1
      %v838 = vrot.slane %v531, 1
      %v839 = vsel %vm812, %v837, %v838
      %v840 = vrot.slane %v805, 1
      %v841 = vrot.slane %v532, 1
      %v842 = vsel %vm812, %v840, %v841
      %v843 = vrot.slane %v806, 1
      %v844 = vrot.slane %v533, 1
      %v845 = vsel %vm812, %v843, %v844
      %v846 = vrot.slane %v807, 1
      %v847 = vrot.slane %v534, 1
      %v848 = vsel %vm812, %v846, %v847
      %v849 = vrot.slane %v808, 1
      %v850 = vrot.slane %v535, 1
      %v851 = vsel %vm812, %v849, %v850
      %v852 = vrot.slane %v809, 1
      %v853 = vrot.slane %v536, 1
      %v854 = vsel %vm812, %v852, %v853
      %v855 = vrot.slane %v810, 1
      %v856 = vrot.slane %v537, 1
      %v857 = vsel %vm812, %v855, %v856
      %v858 = vrot.slane %v811, 1
      %v859 = vrot.slane %v538, 1
      %v860 = vsel %vm812, %v858, %v859
      %861 = vrot.lane.b32.xlu0 %v815, 8
      %v862 = vpop.permute.xlu0 %861
      %863 = vrot.lane.b32.xlu0 %v818, 8
      %v864 = vpop.permute.xlu0 %863
      %865 = vrot.lane.b32.xlu0 %v821, 8
      %v866 = vpop.permute.xlu0 %865
      %867 = vrot.lane.b32.xlu0 %v824, 8
      %v868 = vpop.permute.xlu0 %867
      %869 = vrot.lane.b32.xlu0 %v827, 8
      %v870 = vpop.permute.xlu0 %869
      %871 = vrot.lane.b32.xlu0 %v830, 8
      %v872 = vpop.permute.xlu0 %871
      %873 = vrot.lane.b32.xlu0 %v833, 8
      %v874 = vpop.permute.xlu0 %873
      %875 = vrot.lane.b32.xlu0 %v836, 8
      %v876 = vpop.permute.xlu0 %875
      %877 = vrot.lane.b32.xlu0 %v839, 8
      %v878 = vpop.permute.xlu0 %877
      %879 = vrot.lane.b32.xlu0 %v842, 8
      %v880 = vpop.permute.xlu0 %879
      %881 = vrot.lane.b32.xlu0 %v845, 8
      %v882 = vpop.permute.xlu0 %881
      %883 = vrot.lane.b32.xlu0 %v848, 8
      %v884 = vpop.permute.xlu0 %883
      %885 = vrot.lane.b32.xlu0 %v851, 8
      %v886 = vpop.permute.xlu0 %885
      %887 = vrot.lane.b32.xlu0 %v854, 8
      %v888 = vpop.permute.xlu0 %887
      %889 = vrot.lane.b32.xlu0 %v857, 8
      %v890 = vpop.permute.xlu0 %889
      %891 = vrot.lane.b32.xlu0 %v860, 8
      %v892 = vpop.permute.xlu0 %891
      %v925 = vunpack.c.l.b16 %v282
      %v926 = vunpack.c.l.b16 %v283
      %v927 = vunpack.c.l.b16 %v284
      %v928 = vunpack.c.l.b16 %v285
      %v929 = vunpack.c.l.b16 %v286
      %v930 = vunpack.c.l.b16 %v287
      %v931 = vunpack.c.l.b16 %v288
      %v932 = vunpack.c.l.b16 %v289
      %v933 = vunpack.c.l.b16 %v290
      %v934 = vunpack.c.l.b16 %v291
      %v935 = vunpack.c.l.b16 %v292
      %v936 = vunpack.c.l.b16 %v293
      %v937 = vunpack.c.l.b16 %v294
      %v938 = vunpack.c.l.b16 %v295
      %v939 = vunpack.c.l.b16 %v296
      %v940 = vunpack.c.l.b16 %v297
      %v941 = vunpack.c.l.b16 %v298
      %v942 = vunpack.c.l.b16 %v299
      %v943 = vunpack.c.l.b16 %v300
      %v944 = vunpack.c.l.b16 %v301
      %v945 = vunpack.c.l.b16 %v302
      %v946 = vunpack.c.l.b16 %v303
      %v947 = vunpack.c.l.b16 %v304
      %v948 = vunpack.c.l.b16 %v305
      %v949 = vunpack.c.l.b16 %v306
      %v950 = vunpack.c.l.b16 %v307
      %v951 = vunpack.c.l.b16 %v308
      %v952 = vunpack.c.l.b16 %v309
      %v953 = vunpack.c.l.b16 %v310
      %v954 = vunpack.c.l.b16 %v311
      %v955 = vunpack.c.l.b16 %v312
      %v956 = vunpack.c.l.b16 %v313
      %v957 = vpack.c.b16 %v926, %v925
      %v958 = vpack.c.b16 %v928, %v927
      %v959 = vpack.c.b16 %v930, %v929
      %v960 = vpack.c.b16 %v932, %v931
      %v961 = vpack.c.b16 %v934, %v933
      %v962 = vpack.c.b16 %v936, %v935
      %v963 = vpack.c.b16 %v938, %v937
      %v964 = vpack.c.b16 %v940, %v939
      %v965 = vpack.c.b16 %v942, %v941
      %v966 = vpack.c.b16 %v944, %v943
      %v967 = vpack.c.b16 %v946, %v945
      %v968 = vpack.c.b16 %v948, %v947
      %v969 = vpack.c.b16 %v950, %v949
      %v970 = vpack.c.b16 %v952, %v951
      %v971 = vpack.c.b16 %v954, %v953
      %v972 = vpack.c.b16 %v956, %v955
      %973 = vrot.lane.b32.xlu0 %v957, 12
      %v974 = vpop.permute.xlu0 %973
      %975 = vrot.lane.b32.xlu0 %v958, 12
      %v976 = vpop.permute.xlu0 %975
      %977 = vrot.lane.b32.xlu0 %v959, 12
      %v978 = vpop.permute.xlu0 %977
      %979 = vrot.lane.b32.xlu0 %v960, 12
      %v980 = vpop.permute.xlu0 %979
      %981 = vrot.lane.b32.xlu0 %v961, 12
      %v982 = vpop.permute.xlu0 %981
      %983 = vrot.lane.b32.xlu0 %v962, 12
      %v984 = vpop.permute.xlu0 %983
      %985 = vrot.lane.b32.xlu0 %v963, 12
      %v986 = vpop.permute.xlu0 %985
      %987 = vrot.lane.b32.xlu0 %v964, 12
      %v988 = vpop.permute.xlu0 %987
      %989 = vrot.lane.b32.xlu0 %v965, 12
      %v990 = vpop.permute.xlu0 %989
      %991 = vrot.lane.b32.xlu0 %v966, 12
      %v992 = vpop.permute.xlu0 %991
      %993 = vrot.lane.b32.xlu0 %v967, 12
      %v994 = vpop.permute.xlu0 %993
      %995 = vrot.lane.b32.xlu0 %v968, 12
      %v996 = vpop.permute.xlu0 %995
      %997 = vrot.lane.b32.xlu0 %v969, 12
      %v998 = vpop.permute.xlu0 %997
      %999 = vrot.lane.b32.xlu0 %v970, 12
      %v1000 = vpop.permute.xlu0 %999
      %1001 = vrot.lane.b32.xlu0 %v971, 12
      %v1002 = vpop.permute.xlu0 %1001
      %1003 = vrot.lane.b32.xlu0 %v972, 12
      %v1004 = vpop.permute.xlu0 %1003
      %v1021 = vunpack.c.l.b16 %v314
      %v1022 = vunpack.c.l.b16 %v315
      %v1023 = vunpack.c.l.b16 %v316
      %v1024 = vunpack.c.l.b16 %v317
      %v1025 = vunpack.c.l.b16 %v318
      %v1026 = vunpack.c.l.b16 %v319
      %v1027 = vunpack.c.l.b16 %v320
      %v1028 = vunpack.c.l.b16 %v321
      %v1029 = vunpack.c.l.b16 %v322
      %v1030 = vunpack.c.l.b16 %v323
      %v1031 = vunpack.c.l.b16 %v324
      %v1032 = vunpack.c.l.b16 %v325
      %v1033 = vunpack.c.l.b16 %v326
      %v1034 = vunpack.c.l.b16 %v327
      %v1035 = vunpack.c.l.b16 %v328
      %v1036 = vunpack.c.l.b16 %v329
      %v1037 = vpack.c.b16 %v1021, %v1021
      %v1038 = vpack.c.b16 %v1022, %v1022
      %v1039 = vpack.c.b16 %v1023, %v1023
      %v1040 = vpack.c.b16 %v1024, %v1024
      %v1041 = vpack.c.b16 %v1025, %v1025
      %v1042 = vpack.c.b16 %v1026, %v1026
      %v1043 = vpack.c.b16 %v1027, %v1027
      %v1044 = vpack.c.b16 %v1028, %v1028
      %v1045 = vpack.c.b16 %v1029, %v1029
      %v1046 = vpack.c.b16 %v1030, %v1030
      %v1047 = vpack.c.b16 %v1031, %v1031
      %v1048 = vpack.c.b16 %v1032, %v1032
      %v1049 = vpack.c.b16 %v1033, %v1033
      %v1050 = vpack.c.b16 %v1034, %v1034
      %v1051 = vpack.c.b16 %v1035, %v1035
      %v1052 = vpack.c.b16 %v1036, %v1036
      %v1054 = vshrl.u32 %v957, 16
      %v1056 = vshll.u32 %v957, 16
      %v1058 = vrot.slane %v1056, 1
      %v1059 = vor.u32 %v1054, %v1058
      %v1061 = vshll.u32 %v1037, 16
      %v1063 = vrot.slane %v1061, 1
      %v1064 = vsel %vm539, %v1059, %v1063
      %v1066 = vshrl.u32 %v958, 16
      %v1068 = vshll.u32 %v958, 16
      %v1070 = vrot.slane %v1068, 1
      %v1071 = vor.u32 %v1066, %v1070
      %v1073 = vshll.u32 %v1038, 16
      %v1075 = vrot.slane %v1073, 1
      %v1076 = vsel %vm539, %v1071, %v1075
      %v1078 = vshrl.u32 %v959, 16
      %v1080 = vshll.u32 %v959, 16
      %v1082 = vrot.slane %v1080, 1
      %v1083 = vor.u32 %v1078, %v1082
      %v1085 = vshll.u32 %v1039, 16
      %v1087 = vrot.slane %v1085, 1
      %v1088 = vsel %vm539, %v1083, %v1087
      %v1090 = vshrl.u32 %v960, 16
      %v1092 = vshll.u32 %v960, 16
      %v1094 = vrot.slane %v1092, 1
      %v1095 = vor.u32 %v1090, %v1094
      %v1097 = vshll.u32 %v1040, 16
      %v1099 = vrot.slane %v1097, 1
      %v1100 = vsel %vm539, %v1095, %v1099
      %v1102 = vshrl.u32 %v961, 16
      %v1104 = vshll.u32 %v961, 16
      %v1106 = vrot.slane %v1104, 1
      %v1107 = vor.u32 %v1102, %v1106
      %v1109 = vshll.u32 %v1041, 16
      %v1111 = vrot.slane %v1109, 1
      %v1112 = vsel %vm539, %v1107, %v1111
      %v1114 = vshrl.u32 %v962, 16
      %v1116 = vshll.u32 %v962, 16
      %v1118 = vrot.slane %v1116, 1
      %v1119 = vor.u32 %v1114, %v1118
      %v1121 = vshll.u32 %v1042, 16
      %v1123 = vrot.slane %v1121, 1
      %v1124 = vsel %vm539, %v1119, %v1123
      %v1126 = vshrl.u32 %v963, 16
      %v1128 = vshll.u32 %v963, 16
      %v1130 = vrot.slane %v1128, 1
      %v1131 = vor.u32 %v1126, %v1130
      %v1133 = vshll.u32 %v1043, 16
      %v1135 = vrot.slane %v1133, 1
      %v1136 = vsel %vm539, %v1131, %v1135
      %v1138 = vshrl.u32 %v964, 16
      %v1140 = vshll.u32 %v964, 16
      %v1142 = vrot.slane %v1140, 1
      %v1143 = vor.u32 %v1138, %v1142
      %v1145 = vshll.u32 %v1044, 16
      %v1147 = vrot.slane %v1145, 1
      %v1148 = vsel %vm539, %v1143, %v1147
      %v1150 = vshrl.u32 %v965, 16
      %v1152 = vshll.u32 %v965, 16
      %v1154 = vrot.slane %v1152, 1
      %v1155 = vor.u32 %v1150, %v1154
      %v1157 = vshll.u32 %v1045, 16
      %v1159 = vrot.slane %v1157, 1
      %v1160 = vsel %vm539, %v1155, %v1159
      %v1162 = vshrl.u32 %v966, 16
      %v1164 = vshll.u32 %v966, 16
      %v1166 = vrot.slane %v1164, 1
      %v1167 = vor.u32 %v1162, %v1166
      %v1169 = vshll.u32 %v1046, 16
      %v1171 = vrot.slane %v1169, 1
      %v1172 = vsel %vm539, %v1167, %v1171
      %v1174 = vshrl.u32 %v967, 16
      %v1176 = vshll.u32 %v967, 16
      %v1178 = vrot.slane %v1176, 1
      %v1179 = vor.u32 %v1174, %v1178
      %v1181 = vshll.u32 %v1047, 16
      %v1183 = vrot.slane %v1181, 1
      %v1184 = vsel %vm539, %v1179, %v1183
      %v1186 = vshrl.u32 %v968, 16
      %v1188 = vshll.u32 %v968, 16
      %v1190 = vrot.slane %v1188, 1
      %v1191 = vor.u32 %v1186, %v1190
      %v1193 = vshll.u32 %v1048, 16
      %v1195 = vrot.slane %v1193, 1
      %v1196 = vsel %vm539, %v1191, %v1195
      %v1198 = vshrl.u32 %v969, 16
      %v1200 = vshll.u32 %v969, 16
      %v1202 = vrot.slane %v1200, 1
      %v1203 = vor.u32 %v1198, %v1202
      %v1205 = vshll.u32 %v1049, 16
      %v1207 = vrot.slane %v1205, 1
      %v1208 = vsel %vm539, %v1203, %v1207
      %v1210 = vshrl.u32 %v970, 16
      %v1212 = vshll.u32 %v970, 16
      %v1214 = vrot.slane %v1212, 1
      %v1215 = vor.u32 %v1210, %v1214
      %v1217 = vshll.u32 %v1050, 16
      %v1219 = vrot.slane %v1217, 1
      %v1220 = vsel %vm539, %v1215, %v1219
      %v1222 = vshrl.u32 %v971, 16
      %v1224 = vshll.u32 %v971, 16
      %v1226 = vrot.slane %v1224, 1
      %v1227 = vor.u32 %v1222, %v1226
      %v1229 = vshll.u32 %v1051, 16
      %v1231 = vrot.slane %v1229, 1
      %v1232 = vsel %vm539, %v1227, %v1231
      %v1234 = vshrl.u32 %v972, 16
      %v1236 = vshll.u32 %v972, 16
      %v1238 = vrot.slane %v1236, 1
      %v1239 = vor.u32 %v1234, %v1238
      %v1241 = vshll.u32 %v1052, 16
      %v1243 = vrot.slane %v1241, 1
      %v1244 = vsel %vm539, %v1239, %v1243
      %1245 = vrot.lane.b32.xlu0 %v1064, 16
      %v1246 = vpop.permute.xlu0 %1245
      %1247 = vrot.lane.b32.xlu0 %v1076, 16
      %v1248 = vpop.permute.xlu0 %1247
      %1249 = vrot.lane.b32.xlu0 %v1088, 16
      %v1250 = vpop.permute.xlu0 %1249
      %1251 = vrot.lane.b32.xlu0 %v1100, 16
      %v1252 = vpop.permute.xlu0 %1251
      %1253 = vrot.lane.b32.xlu0 %v1112, 16
      %v1254 = vpop.permute.xlu0 %1253
      %1255 = vrot.lane.b32.xlu0 %v1124, 16
      %v1256 = vpop.permute.xlu0 %1255
      %1257 = vrot.lane.b32.xlu0 %v1136, 16
      %v1258 = vpop.permute.xlu0 %1257
      %1259 = vrot.lane.b32.xlu0 %v1148, 16
      %v1260 = vpop.permute.xlu0 %1259
      %1261 = vrot.lane.b32.xlu0 %v1160, 16
      %v1262 = vpop.permute.xlu0 %1261
      %1263 = vrot.lane.b32.xlu0 %v1172, 16
      %v1264 = vpop.permute.xlu0 %1263
      %1265 = vrot.lane.b32.xlu0 %v1184, 16
      %v1266 = vpop.permute.xlu0 %1265
      %1267 = vrot.lane.b32.xlu0 %v1196, 16
      %v1268 = vpop.permute.xlu0 %1267
      %1269 = vrot.lane.b32.xlu0 %v1208, 16
      %v1270 = vpop.permute.xlu0 %1269
      %1271 = vrot.lane.b32.xlu0 %v1220, 16
      %v1272 = vpop.permute.xlu0 %1271
      %1273 = vrot.lane.b32.xlu0 %v1232, 16
      %v1274 = vpop.permute.xlu0 %1273
      %1275 = vrot.lane.b32.xlu0 %v1244, 16
      %v1276 = vpop.permute.xlu0 %1275
      %v1293 = vunpack.c.l.b16 %v330
      %v1294 = vunpack.c.l.b16 %v331
      %v1295 = vunpack.c.l.b16 %v332
      %v1296 = vunpack.c.l.b16 %v333
      %v1297 = vunpack.c.l.b16 %v334
      %v1298 = vunpack.c.l.b16 %v335
      %v1299 = vunpack.c.l.b16 %v336
      %v1300 = vunpack.c.l.b16 %v337
      %v1301 = vunpack.c.l.b16 %v338
      %v1302 = vunpack.c.l.b16 %v339
      %v1303 = vunpack.c.l.b16 %v340
      %v1304 = vunpack.c.l.b16 %v341
      %v1305 = vunpack.c.l.b16 %v342
      %v1306 = vunpack.c.l.b16 %v343
      %v1307 = vunpack.c.l.b16 %v344
      %v1308 = vunpack.c.l.b16 %v345
      %v1309 = vpack.c.b16 %v926, %v1293
      %v1310 = vpack.c.b16 %v928, %v1294
      %v1311 = vpack.c.b16 %v930, %v1295
      %v1312 = vpack.c.b16 %v932, %v1296
      %v1313 = vpack.c.b16 %v934, %v1297
      %v1314 = vpack.c.b16 %v936, %v1298
      %v1315 = vpack.c.b16 %v938, %v1299
      %v1316 = vpack.c.b16 %v940, %v1300
      %v1317 = vpack.c.b16 %v942, %v1301
      %v1318 = vpack.c.b16 %v944, %v1302
      %v1319 = vpack.c.b16 %v946, %v1303
      %v1320 = vpack.c.b16 %v948, %v1304
      %v1321 = vpack.c.b16 %v950, %v1305
      %v1322 = vpack.c.b16 %v952, %v1306
      %v1323 = vpack.c.b16 %v954, %v1307
      %v1324 = vpack.c.b16 %v956, %v1308
      %v1325 = vrot.slane %v1309, 1
      %v1326 = vrot.slane %v1037, 1
      %v1327 = vsel %vm812, %v1325, %v1326
      %v1328 = vrot.slane %v1310, 1
      %v1329 = vrot.slane %v1038, 1
      %v1330 = vsel %vm812, %v1328, %v1329
      %v1331 = vrot.slane %v1311, 1
      %v1332 = vrot.slane %v1039, 1
      %v1333 = vsel %vm812, %v1331, %v1332
      %v1334 = vrot.slane %v1312, 1
      %v1335 = vrot.slane %v1040, 1
      %v1336 = vsel %vm812, %v1334, %v1335
      %v1337 = vrot.slane %v1313, 1
      %v1338 = vrot.slane %v1041, 1
      %v1339 = vsel %vm812, %v1337, %v1338
      %v1340 = vrot.slane %v1314, 1
      %v1341 = vrot.slane %v1042, 1
      %v1342 = vsel %vm812, %v1340, %v1341
      %v1343 = vrot.slane %v1315, 1
      %v1344 = vrot.slane %v1043, 1
      %v1345 = vsel %vm812, %v1343, %v1344
      %v1346 = vrot.slane %v1316, 1
      %v1347 = vrot.slane %v1044, 1
      %v1348 = vsel %vm812, %v1346, %v1347
      %v1349 = vrot.slane %v1317, 1
      %v1350 = vrot.slane %v1045, 1
      %v1351 = vsel %vm812, %v1349, %v1350
      %v1352 = vrot.slane %v1318, 1
      %v1353 = vrot.slane %v1046, 1
      %v1354 = vsel %vm812, %v1352, %v1353
      %v1355 = vrot.slane %v1319, 1
      %v1356 = vrot.slane %v1047, 1
      %v1357 = vsel %vm812, %v1355, %v1356
      %v1358 = vrot.slane %v1320, 1
      %v1359 = vrot.slane %v1048, 1
      %v1360 = vsel %vm812, %v1358, %v1359
      %v1361 = vrot.slane %v1321, 1
      %v1362 = vrot.slane %v1049, 1
      %v1363 = vsel %vm812, %v1361, %v1362
      %v1364 = vrot.slane %v1322, 1
      %v1365 = vrot.slane %v1050, 1
      %v1366 = vsel %vm812, %v1364, %v1365
      %v1367 = vrot.slane %v1323, 1
      %v1368 = vrot.slane %v1051, 1
      %v1369 = vsel %vm812, %v1367, %v1368
      %v1370 = vrot.slane %v1324, 1
      %v1371 = vrot.slane %v1052, 1
      %v1372 = vsel %vm812, %v1370, %v1371
      %1373 = vrot.lane.b32.xlu0 %v1327, 20
      %v1374 = vpop.permute.xlu0 %1373
      %1375 = vrot.lane.b32.xlu0 %v1330, 20
      %v1376 = vpop.permute.xlu0 %1375
      %1377 = vrot.lane.b32.xlu0 %v1333, 20
      %v1378 = vpop.permute.xlu0 %1377
      %1379 = vrot.lane.b32.xlu0 %v1336, 20
      %v1380 = vpop.permute.xlu0 %1379
      %1381 = vrot.lane.b32.xlu0 %v1339, 20
      %v1382 = vpop.permute.xlu0 %1381
      %1383 = vrot.lane.b32.xlu0 %v1342, 20
      %v1384 = vpop.permute.xlu0 %1383
      %1385 = vrot.lane.b32.xlu0 %v1345, 20
      %v1386 = vpop.permute.xlu0 %1385
      %1387 = vrot.lane.b32.xlu0 %v1348, 20
      %v1388 = vpop.permute.xlu0 %1387
      %1389 = vrot.lane.b32.xlu0 %v1351, 20
      %v1390 = vpop.permute.xlu0 %1389
      %1391 = vrot.lane.b32.xlu0 %v1354, 20
      %v1392 = vpop.permute.xlu0 %1391
      %1393 = vrot.lane.b32.xlu0 %v1357, 20
      %v1394 = vpop.permute.xlu0 %1393
      %1395 = vrot.lane.b32.xlu0 %v1360, 20
      %v1396 = vpop.permute.xlu0 %1395
      %1397 = vrot.lane.b32.xlu0 %v1363, 20
      %v1398 = vpop.permute.xlu0 %1397
      %1399 = vrot.lane.b32.xlu0 %v1366, 20
      %v1400 = vpop.permute.xlu0 %1399
      %1401 = vrot.lane.b32.xlu0 %v1369, 20
      %v1402 = vpop.permute.xlu0 %1401
      %1403 = vrot.lane.b32.xlu0 %v1372, 20
      %v1404 = vpop.permute.xlu0 %1403
      %v1437 = vunpack.c.l.b16 %v347
      %v1438 = vunpack.c.l.b16 %v348
      %v1439 = vunpack.c.l.b16 %v349
      %v1440 = vunpack.c.l.b16 %v350
      %v1441 = vunpack.c.l.b16 %v351
      %v1442 = vunpack.c.l.b16 %v352
      %v1443 = vunpack.c.l.b16 %v353
      %v1444 = vunpack.c.l.b16 %v354
      %v1445 = vunpack.c.l.b16 %v355
      %v1446 = vunpack.c.l.b16 %v356
      %v1447 = vunpack.c.l.b16 %v357
      %v1448 = vunpack.c.l.b16 %v358
      %v1449 = vunpack.c.l.b16 %v359
      %v1450 = vunpack.c.l.b16 %v360
      %v1451 = vunpack.c.l.b16 %v361
      %v1452 = vunpack.c.l.b16 %v362
      %v1453 = vunpack.c.l.b16 %v363
      %v1454 = vunpack.c.l.b16 %v364
      %v1455 = vunpack.c.l.b16 %v365
      %v1456 = vunpack.c.l.b16 %v366
      %v1457 = vunpack.c.l.b16 %v367
      %v1458 = vunpack.c.l.b16 %v368
      %v1459 = vunpack.c.l.b16 %v369
      %v1460 = vunpack.c.l.b16 %v370
      %v1461 = vunpack.c.l.b16 %v371
      %v1462 = vunpack.c.l.b16 %v372
      %v1463 = vunpack.c.l.b16 %v373
      %v1464 = vunpack.c.l.b16 %v374
      %v1465 = vunpack.c.l.b16 %v375
      %v1466 = vunpack.c.l.b16 %v376
      %v1467 = vunpack.c.l.b16 %v377
      %v1468 = vunpack.c.l.b16 %v378
      %v1469 = vpack.c.b16 %v1438, %v1437
      %v1470 = vpack.c.b16 %v1440, %v1439
      %v1471 = vpack.c.b16 %v1442, %v1441
      %v1472 = vpack.c.b16 %v1444, %v1443
      %v1473 = vpack.c.b16 %v1446, %v1445
      %v1474 = vpack.c.b16 %v1448, %v1447
      %v1475 = vpack.c.b16 %v1450, %v1449
      %v1476 = vpack.c.b16 %v1452, %v1451
      %v1477 = vpack.c.b16 %v1454, %v1453
      %v1478 = vpack.c.b16 %v1456, %v1455
      %v1479 = vpack.c.b16 %v1458, %v1457
      %v1480 = vpack.c.b16 %v1460, %v1459
      %v1481 = vpack.c.b16 %v1462, %v1461
      %v1482 = vpack.c.b16 %v1464, %v1463
      %v1483 = vpack.c.b16 %v1466, %v1465
      %v1484 = vpack.c.b16 %v1468, %v1467
      %1485 = vrot.lane.b32.xlu0 %v1469, 24
      %v1486 = vpop.permute.xlu0 %1485
      %1487 = vrot.lane.b32.xlu0 %v1470, 24
      %v1488 = vpop.permute.xlu0 %1487
      %1489 = vrot.lane.b32.xlu0 %v1471, 24
      %v1490 = vpop.permute.xlu0 %1489
      %1491 = vrot.lane.b32.xlu0 %v1472, 24
      %v1492 = vpop.permute.xlu0 %1491
      %1493 = vrot.lane.b32.xlu0 %v1473, 24
      %v1494 = vpop.permute.xlu0 %1493
      %1495 = vrot.lane.b32.xlu0 %v1474, 24
      %v1496 = vpop.permute.xlu0 %1495
      %1497 = vrot.lane.b32.xlu0 %v1475, 24
      %v1498 = vpop.permute.xlu0 %1497
      %1499 = vrot.lane.b32.xlu0 %v1476, 24
      %v1500 = vpop.permute.xlu0 %1499
      %1501 = vrot.lane.b32.xlu0 %v1477, 24
      %v1502 = vpop.permute.xlu0 %1501
      %1503 = vrot.lane.b32.xlu0 %v1478, 24
      %v1504 = vpop.permute.xlu0 %1503
      %1505 = vrot.lane.b32.xlu0 %v1479, 24
      %v1506 = vpop.permute.xlu0 %1505
      %1507 = vrot.lane.b32.xlu0 %v1480, 24
      %v1508 = vpop.permute.xlu0 %1507
      %1509 = vrot.lane.b32.xlu0 %v1481, 24
      %v1510 = vpop.permute.xlu0 %1509
      %1511 = vrot.lane.b32.xlu0 %v1482, 24
      %v1512 = vpop.permute.xlu0 %1511
      %1513 = vrot.lane.b32.xlu0 %v1483, 24
      %v1514 = vpop.permute.xlu0 %1513
      %1515 = vrot.lane.b32.xlu0 %v1484, 24
      %v1516 = vpop.permute.xlu0 %1515
      %v1533 = vunpack.c.l.b16 %v379
      %v1534 = vunpack.c.l.b16 %v380
      %v1535 = vunpack.c.l.b16 %v381
      %v1536 = vunpack.c.l.b16 %v382
      %v1537 = vunpack.c.l.b16 %v383
      %v1538 = vunpack.c.l.b16 %v384
      %v1539 = vunpack.c.l.b16 %v385
      %v1540 = vunpack.c.l.b16 %v386
      %v1541 = vunpack.c.l.b16 %v387
      %v1542 = vunpack.c.l.b16 %v388
      %v1543 = vunpack.c.l.b16 %v389
      %v1544 = vunpack.c.l.b16 %v390
      %v1545 = vunpack.c.l.b16 %v391
      %v1546 = vunpack.c.l.b16 %v392
      %v1547 = vunpack.c.l.b16 %v393
      %v1548 = vunpack.c.l.b16 %v394
      %v1549 = vpack.c.b16 %v1533, %v1533
      %v1550 = vpack.c.b16 %v1534, %v1534
      %v1551 = vpack.c.b16 %v1535, %v1535
      %v1552 = vpack.c.b16 %v1536, %v1536
      %v1553 = vpack.c.b16 %v1537, %v1537
      %v1554 = vpack.c.b16 %v1538, %v1538
      %v1555 = vpack.c.b16 %v1539, %v1539
      %v1556 = vpack.c.b16 %v1540, %v1540
      %v1557 = vpack.c.b16 %v1541, %v1541
      %v1558 = vpack.c.b16 %v1542, %v1542
      %v1559 = vpack.c.b16 %v1543, %v1543
      %v1560 = vpack.c.b16 %v1544, %v1544
      %v1561 = vpack.c.b16 %v1545, %v1545
      %v1562 = vpack.c.b16 %v1546, %v1546
      %v1563 = vpack.c.b16 %v1547, %v1547
      %v1564 = vpack.c.b16 %v1548, %v1548
      %v1566 = vshrl.u32 %v1469, 16
      %v1568 = vshll.u32 %v1469, 16
      %v1570 = vrot.slane %v1568, 1
      %v1571 = vor.u32 %v1566, %v1570
      %v1573 = vshll.u32 %v1549, 16
      %v1575 = vrot.slane %v1573, 1
      %v1576 = vsel %vm539, %v1571, %v1575
      %v1578 = vshrl.u32 %v1470, 16
      %v1580 = vshll.u32 %v1470, 16
      %v1582 = vrot.slane %v1580, 1
      %v1583 = vor.u32 %v1578, %v1582
      %v1585 = vshll.u32 %v1550, 16
      %v1587 = vrot.slane %v1585, 1
      %v1588 = vsel %vm539, %v1583, %v1587
      %v1590 = vshrl.u32 %v1471, 16
      %v1592 = vshll.u32 %v1471, 16
      %v1594 = vrot.slane %v1592, 1
      %v1595 = vor.u32 %v1590, %v1594
      %v1597 = vshll.u32 %v1551, 16
      %v1599 = vrot.slane %v1597, 1
      %v1600 = vsel %vm539, %v1595, %v1599
      %v1602 = vshrl.u32 %v1472, 16
      %v1604 = vshll.u32 %v1472, 16
      %v1606 = vrot.slane %v1604, 1
      %v1607 = vor.u32 %v1602, %v1606
      %v1609 = vshll.u32 %v1552, 16
      %v1611 = vrot.slane %v1609, 1
      %v1612 = vsel %vm539, %v1607, %v1611
      %v1614 = vshrl.u32 %v1473, 16
      %v1616 = vshll.u32 %v1473, 16
      %v1618 = vrot.slane %v1616, 1
      %v1619 = vor.u32 %v1614, %v1618
      %v1621 = vshll.u32 %v1553, 16
      %v1623 = vrot.slane %v1621, 1
      %v1624 = vsel %vm539, %v1619, %v1623
      %v1626 = vshrl.u32 %v1474, 16
      %v1628 = vshll.u32 %v1474, 16
      %v1630 = vrot.slane %v1628, 1
      %v1631 = vor.u32 %v1626, %v1630
      %v1633 = vshll.u32 %v1554, 16
      %v1635 = vrot.slane %v1633, 1
      %v1636 = vsel %vm539, %v1631, %v1635
      %v1638 = vshrl.u32 %v1475, 16
      %v1640 = vshll.u32 %v1475, 16
      %v1642 = vrot.slane %v1640, 1
      %v1643 = vor.u32 %v1638, %v1642
      %v1645 = vshll.u32 %v1555, 16
      %v1647 = vrot.slane %v1645, 1
      %v1648 = vsel %vm539, %v1643, %v1647
      %v1650 = vshrl.u32 %v1476, 16
      %v1652 = vshll.u32 %v1476, 16
      %v1654 = vrot.slane %v1652, 1
      %v1655 = vor.u32 %v1650, %v1654
      %v1657 = vshll.u32 %v1556, 16
      %v1659 = vrot.slane %v1657, 1
      %v1660 = vsel %vm539, %v1655, %v1659
      %v1662 = vshrl.u32 %v1477, 16
      %v1664 = vshll.u32 %v1477, 16
      %v1666 = vrot.slane %v1664, 1
      %v1667 = vor.u32 %v1662, %v1666
      %v1669 = vshll.u32 %v1557, 16
      %v1671 = vrot.slane %v1669, 1
      %v1672 = vsel %vm539, %v1667, %v1671
      %v1674 = vshrl.u32 %v1478, 16
      %v1676 = vshll.u32 %v1478, 16
      %v1678 = vrot.slane %v1676, 1
      %v1679 = vor.u32 %v1674, %v1678
      %v1681 = vshll.u32 %v1558, 16
      %v1683 = vrot.slane %v1681, 1
      %v1684 = vsel %vm539, %v1679, %v1683
      %v1686 = vshrl.u32 %v1479, 16
      %v1688 = vshll.u32 %v1479, 16
      %v1690 = vrot.slane %v1688, 1
      %v1691 = vor.u32 %v1686, %v1690
      %v1693 = vshll.u32 %v1559, 16
      %v1695 = vrot.slane %v1693, 1
      %v1696 = vsel %vm539, %v1691, %v1695
      %v1698 = vshrl.u32 %v1480, 16
      %v1700 = vshll.u32 %v1480, 16
      %v1702 = vrot.slane %v1700, 1
      %v1703 = vor.u32 %v1698, %v1702
      %v1705 = vshll.u32 %v1560, 16
      %v1707 = vrot.slane %v1705, 1
      %v1708 = vsel %vm539, %v1703, %v1707
      %v1710 = vshrl.u32 %v1481, 16
      %v1712 = vshll.u32 %v1481, 16
      %v1714 = vrot.slane %v1712, 1
      %v1715 = vor.u32 %v1710, %v1714
      %v1717 = vshll.u32 %v1561, 16
      %v1719 = vrot.slane %v1717, 1
      %v1720 = vsel %vm539, %v1715, %v1719
      %v1722 = vshrl.u32 %v1482, 16
      %v1724 = vshll.u32 %v1482, 16
      %v1726 = vrot.slane %v1724, 1
      %v1727 = vor.u32 %v1722, %v1726
      %v1729 = vshll.u32 %v1562, 16
      %v1731 = vrot.slane %v1729, 1
      %v1732 = vsel %vm539, %v1727, %v1731
      %v1734 = vshrl.u32 %v1483, 16
      %v1736 = vshll.u32 %v1483, 16
      %v1738 = vrot.slane %v1736, 1
      %v1739 = vor.u32 %v1734, %v1738
      %v1741 = vshll.u32 %v1563, 16
      %v1743 = vrot.slane %v1741, 1
      %v1744 = vsel %vm539, %v1739, %v1743
      %v1746 = vshrl.u32 %v1484, 16
      %v1748 = vshll.u32 %v1484, 16
      %v1750 = vrot.slane %v1748, 1
      %v1751 = vor.u32 %v1746, %v1750
      %v1753 = vshll.u32 %v1564, 16
      %v1755 = vrot.slane %v1753, 1
      %v1756 = vsel %vm539, %v1751, %v1755
      %1757 = vrot.lane.b32.xlu0 %v1576, 28
      %v1758 = vpop.permute.xlu0 %1757
      %1759 = vrot.lane.b32.xlu0 %v1588, 28
      %v1760 = vpop.permute.xlu0 %1759
      %1761 = vrot.lane.b32.xlu0 %v1600, 28
      %v1762 = vpop.permute.xlu0 %1761
      %1763 = vrot.lane.b32.xlu0 %v1612, 28
      %v1764 = vpop.permute.xlu0 %1763
      %1765 = vrot.lane.b32.xlu0 %v1624, 28
      %v1766 = vpop.permute.xlu0 %1765
      %1767 = vrot.lane.b32.xlu0 %v1636, 28
      %v1768 = vpop.permute.xlu0 %1767
      %1769 = vrot.lane.b32.xlu0 %v1648, 28
      %v1770 = vpop.permute.xlu0 %1769
      %1771 = vrot.lane.b32.xlu0 %v1660, 28
      %v1772 = vpop.permute.xlu0 %1771
      %1773 = vrot.lane.b32.xlu0 %v1672, 28
      %v1774 = vpop.permute.xlu0 %1773
      %1775 = vrot.lane.b32.xlu0 %v1684, 28
      %v1776 = vpop.permute.xlu0 %1775
      %1777 = vrot.lane.b32.xlu0 %v1696, 28
      %v1778 = vpop.permute.xlu0 %1777
      %1779 = vrot.lane.b32.xlu0 %v1708, 28
      %v1780 = vpop.permute.xlu0 %1779
      %1781 = vrot.lane.b32.xlu0 %v1720, 28
      %v1782 = vpop.permute.xlu0 %1781
      %1783 = vrot.lane.b32.xlu0 %v1732, 28
      %v1784 = vpop.permute.xlu0 %1783
      %1785 = vrot.lane.b32.xlu0 %v1744, 28
      %v1786 = vpop.permute.xlu0 %1785
      %1787 = vrot.lane.b32.xlu0 %v1756, 28
      %v1788 = vpop.permute.xlu0 %1787
      %v1805 = vunpack.c.l.b16 %v395
      %v1806 = vunpack.c.l.b16 %v396
      %v1807 = vunpack.c.l.b16 %v397
      %v1808 = vunpack.c.l.b16 %v398
      %v1809 = vunpack.c.l.b16 %v399
      %v1810 = vunpack.c.l.b16 %v400
      %v1811 = vunpack.c.l.b16 %v401
      %v1812 = vunpack.c.l.b16 %v402
      %v1813 = vunpack.c.l.b16 %v403
      %v1814 = vunpack.c.l.b16 %v404
      %v1815 = vunpack.c.l.b16 %v405
      %v1816 = vunpack.c.l.b16 %v406
      %v1817 = vunpack.c.l.b16 %v407
      %v1818 = vunpack.c.l.b16 %v408
      %v1819 = vunpack.c.l.b16 %v409
      %v1820 = vunpack.c.l.b16 %v410
      %v1821 = vpack.c.b16 %v1438, %v1805
      %v1822 = vpack.c.b16 %v1440, %v1806
      %v1823 = vpack.c.b16 %v1442, %v1807
      %v1824 = vpack.c.b16 %v1444, %v1808
      %v1825 = vpack.c.b16 %v1446, %v1809
      %v1826 = vpack.c.b16 %v1448, %v1810
      %v1827 = vpack.c.b16 %v1450, %v1811
      %v1828 = vpack.c.b16 %v1452, %v1812
      %v1829 = vpack.c.b16 %v1454, %v1813
      %v1830 = vpack.c.b16 %v1456, %v1814
      %v1831 = vpack.c.b16 %v1458, %v1815
      %v1832 = vpack.c.b16 %v1460, %v1816
      %v1833 = vpack.c.b16 %v1462, %v1817
      %v1834 = vpack.c.b16 %v1464, %v1818
      %v1835 = vpack.c.b16 %v1466, %v1819
      %v1836 = vpack.c.b16 %v1468, %v1820
      %v1837 = vrot.slane %v1821, 1
      %v1838 = vrot.slane %v1549, 1
      %v1839 = vsel %vm812, %v1837, %v1838
      %v1840 = vrot.slane %v1822, 1
      %v1841 = vrot.slane %v1550, 1
      %v1842 = vsel %vm812, %v1840, %v1841
      %v1843 = vrot.slane %v1823, 1
      %v1844 = vrot.slane %v1551, 1
      %v1845 = vsel %vm812, %v1843, %v1844
      %v1846 = vrot.slane %v1824, 1
      %v1847 = vrot.slane %v1552, 1
      %v1848 = vsel %vm812, %v1846, %v1847
      %v1849 = vrot.slane %v1825, 1
      %v1850 = vrot.slane %v1553, 1
      %v1851 = vsel %vm812, %v1849, %v1850
      %v1852 = vrot.slane %v1826, 1
      %v1853 = vrot.slane %v1554, 1
      %v1854 = vsel %vm812, %v1852, %v1853
      %v1855 = vrot.slane %v1827, 1
      %v1856 = vrot.slane %v1555, 1
      %v1857 = vsel %vm812, %v1855, %v1856
      %v1858 = vrot.slane %v1828, 1
      %v1859 = vrot.slane %v1556, 1
      %v1860 = vsel %vm812, %v1858, %v1859
      %v1861 = vrot.slane %v1829, 1
      %v1862 = vrot.slane %v1557, 1
      %v1863 = vsel %vm812, %v1861, %v1862
      %v1864 = vrot.slane %v1830, 1
      %v1865 = vrot.slane %v1558, 1
      %v1866 = vsel %vm812, %v1864, %v1865
      %v1867 = vrot.slane %v1831, 1
      %v1868 = vrot.slane %v1559, 1
      %v1869 = vsel %vm812, %v1867, %v1868
      %v1870 = vrot.slane %v1832, 1
      %v1871 = vrot.slane %v1560, 1
      %v1872 = vsel %vm812, %v1870, %v1871
      %v1873 = vrot.slane %v1833, 1
      %v1874 = vrot.slane %v1561, 1
      %v1875 = vsel %vm812, %v1873, %v1874
      %v1876 = vrot.slane %v1834, 1
      %v1877 = vrot.slane %v1562, 1
      %v1878 = vsel %vm812, %v1876, %v1877
      %v1879 = vrot.slane %v1835, 1
      %v1880 = vrot.slane %v1563, 1
      %v1881 = vsel %vm812, %v1879, %v1880
      %v1882 = vrot.slane %v1836, 1
      %v1883 = vrot.slane %v1564, 1
      %v1884 = vsel %vm812, %v1882, %v1883
      %1885 = vrot.lane.b32.xlu0 %v1839, 32
      %v1886 = vpop.permute.xlu0 %1885
      %1887 = vrot.lane.b32.xlu0 %v1842, 32
      %v1888 = vpop.permute.xlu0 %1887
      %1889 = vrot.lane.b32.xlu0 %v1845, 32
      %v1890 = vpop.permute.xlu0 %1889
      %1891 = vrot.lane.b32.xlu0 %v1848, 32
      %v1892 = vpop.permute.xlu0 %1891
      %1893 = vrot.lane.b32.xlu0 %v1851, 32
      %v1894 = vpop.permute.xlu0 %1893
      %1895 = vrot.lane.b32.xlu0 %v1854, 32
      %v1896 = vpop.permute.xlu0 %1895
      %1897 = vrot.lane.b32.xlu0 %v1857, 32
      %v1898 = vpop.permute.xlu0 %1897
      %1899 = vrot.lane.b32.xlu0 %v1860, 32
      %v1900 = vpop.permute.xlu0 %1899
      %1901 = vrot.lane.b32.xlu0 %v1863, 32
      %v1902 = vpop.permute.xlu0 %1901
      %1903 = vrot.lane.b32.xlu0 %v1866, 32
      %v1904 = vpop.permute.xlu0 %1903
      %1905 = vrot.lane.b32.xlu0 %v1869, 32
      %v1906 = vpop.permute.xlu0 %1905
      %1907 = vrot.lane.b32.xlu0 %v1872, 32
      %v1908 = vpop.permute.xlu0 %1907
      %1909 = vrot.lane.b32.xlu0 %v1875, 32
      %v1910 = vpop.permute.xlu0 %1909
      %1911 = vrot.lane.b32.xlu0 %v1878, 32
      %v1912 = vpop.permute.xlu0 %1911
      %1913 = vrot.lane.b32.xlu0 %v1881, 32
      %v1914 = vpop.permute.xlu0 %1913
      %1915 = vrot.lane.b32.xlu0 %v1884, 32
      %v1916 = vpop.permute.xlu0 %1915
      %vm1917 = vcmask 31744
      %v1919 = vsel %vm1917, %v475, %v733
      %v1921 = vsel %vm1917, %v476, %v735
      %v1923 = vsel %vm1917, %v477, %v737
      %v1925 = vsel %vm1917, %v478, %v739
      %v1927 = vsel %vm1917, %v479, %v741
      %v1929 = vsel %vm1917, %v480, %v743
      %v1931 = vsel %vm1917, %v481, %v745
      %v1933 = vsel %vm1917, %v482, %v747
      %v1935 = vsel %vm1917, %v483, %v749
      %v1937 = vsel %vm1917, %v484, %v751
      %v1939 = vsel %vm1917, %v485, %v753
      %v1941 = vsel %vm1917, %v486, %v755
      %v1943 = vsel %vm1917, %v487, %v757
      %v1945 = vsel %vm1917, %v488, %v759
      %v1947 = vsel %vm1917, %v489, %v761
      %v1949 = vsel %vm1917, %v490, %v763
      %vm1950 = vcmask 64512
      %v1952 = vsel %vm1950, %v1919, %v862
      %v1954 = vsel %vm1950, %v1921, %v864
      %v1956 = vsel %vm1950, %v1923, %v866
      %v1958 = vsel %vm1950, %v1925, %v868
      %v1960 = vsel %vm1950, %v1927, %v870
      %v1962 = vsel %vm1950, %v1929, %v872
      %v1964 = vsel %vm1950, %v1931, %v874
      %v1966 = vsel %vm1950, %v1933, %v876
      %v1968 = vsel %vm1950, %v1935, %v878
      %v1970 = vsel %vm1950, %v1937, %v880
      %v1972 = vsel %vm1950, %v1939, %v882
      %v1974 = vsel %vm1950, %v1941, %v884
      %v1976 = vsel %vm1950, %v1943, %v886
      %v1978 = vsel %vm1950, %v1945, %v888
      %v1980 = vsel %vm1950, %v1947, %v890
      %v1982 = vsel %vm1950, %v1949, %v892
      %vm1983 = vcmask 97280
      %v1985 = vsel %vm1983, %v1952, %v974
      %v1987 = vsel %vm1983, %v1954, %v976
      %v1989 = vsel %vm1983, %v1956, %v978
      %v1991 = vsel %vm1983, %v1958, %v980
      %v1993 = vsel %vm1983, %v1960, %v982
      %v1995 = vsel %vm1983, %v1962, %v984
      %v1997 = vsel %vm1983, %v1964, %v986
      %v1999 = vsel %vm1983, %v1966, %v988
      %v2001 = vsel %vm1983, %v1968, %v990
      %v2003 = vsel %vm1983, %v1970, %v992
      %v2005 = vsel %vm1983, %v1972, %v994
      %v2007 = vsel %vm1983, %v1974, %v996
      %v2009 = vsel %vm1983, %v1976, %v998
      %v2011 = vsel %vm1983, %v1978, %v1000
      %v2013 = vsel %vm1983, %v1980, %v1002
      %v2015 = vsel %vm1983, %v1982, %v1004
      %vm2016 = vcmask 130048
      %v2018 = vsel %vm2016, %v1985, %v1246
      %v2020 = vsel %vm2016, %v1987, %v1248
      %v2022 = vsel %vm2016, %v1989, %v1250
      %v2024 = vsel %vm2016, %v1991, %v1252
      %v2026 = vsel %vm2016, %v1993, %v1254
      %v2028 = vsel %vm2016, %v1995, %v1256
      %v2030 = vsel %vm2016, %v1997, %v1258
      %v2032 = vsel %vm2016, %v1999, %v1260
      %v2034 = vsel %vm2016, %v2001, %v1262
      %v2036 = vsel %vm2016, %v2003, %v1264
      %v2038 = vsel %vm2016, %v2005, %v1266
      %v2040 = vsel %vm2016, %v2007, %v1268
      %v2042 = vsel %vm2016, %v2009, %v1270
      %v2044 = vsel %vm2016, %v2011, %v1272
      %v2046 = vsel %vm2016, %v2013, %v1274
      %v2048 = vsel %vm2016, %v2015, %v1276
      %vm2049 = vcmask 162816
      %v2051 = vsel %vm2049, %v2018, %v1374
      %v2053 = vsel %vm2049, %v2020, %v1376
      %v2055 = vsel %vm2049, %v2022, %v1378
      %v2057 = vsel %vm2049, %v2024, %v1380
      %v2059 = vsel %vm2049, %v2026, %v1382
      %v2061 = vsel %vm2049, %v2028, %v1384
      %v2063 = vsel %vm2049, %v2030, %v1386
      %v2065 = vsel %vm2049, %v2032, %v1388
      %v2067 = vsel %vm2049, %v2034, %v1390
      %v2069 = vsel %vm2049, %v2036, %v1392
      %v2071 = vsel %vm2049, %v2038, %v1394
      %v2073 = vsel %vm2049, %v2040, %v1396
      %v2075 = vsel %vm2049, %v2042, %v1398
      %v2077 = vsel %vm2049, %v2044, %v1400
      %v2079 = vsel %vm2049, %v2046, %v1402
      %v2081 = vsel %vm2049, %v2048, %v1404
      %vm2082 = vcmask 195584
      %v2084 = vsel %vm2082, %v2051, %v1486
      %v2086 = vsel %vm2082, %v2053, %v1488
      %v2088 = vsel %vm2082, %v2055, %v1490
      %v2090 = vsel %vm2082, %v2057, %v1492
      %v2092 = vsel %vm2082, %v2059, %v1494
      %v2094 = vsel %vm2082, %v2061, %v1496
      %v2096 = vsel %vm2082, %v2063, %v1498
      %v2098 = vsel %vm2082, %v2065, %v1500
      %v2100 = vsel %vm2082, %v2067, %v1502
      %v2102 = vsel %vm2082, %v2069, %v1504
      %v2104 = vsel %vm2082, %v2071, %v1506
      %v2106 = vsel %vm2082, %v2073, %v1508
      %v2108 = vsel %vm2082, %v2075, %v1510
      %v2110 = vsel %vm2082, %v2077, %v1512
      %v2112 = vsel %vm2082, %v2079, %v1514
      %v2114 = vsel %vm2082, %v2081, %v1516
      %vm2115 = vcmask 228352
      %v2117 = vsel %vm2115, %v2084, %v1758
      %v2119 = vsel %vm2115, %v2086, %v1760
      %v2121 = vsel %vm2115, %v2088, %v1762
      %v2123 = vsel %vm2115, %v2090, %v1764
      %v2125 = vsel %vm2115, %v2092, %v1766
      %v2127 = vsel %vm2115, %v2094, %v1768
      %v2129 = vsel %vm2115, %v2096, %v1770
      %v2131 = vsel %vm2115, %v2098, %v1772
      %v2133 = vsel %vm2115, %v2100, %v1774
      %v2135 = vsel %vm2115, %v2102, %v1776
      %v2137 = vsel %vm2115, %v2104, %v1778
      %v2139 = vsel %vm2115, %v2106, %v1780
      %v2141 = vsel %vm2115, %v2108, %v1782
      %v2143 = vsel %vm2115, %v2110, %v1784
      %v2145 = vsel %vm2115, %v2112, %v1786
      %v2147 = vsel %vm2115, %v2114, %v1788
      %vm2148 = vcmask 261120
      %v2150 = vsel %vm2148, %v2117, %v1886
      %v2152 = vsel %vm2148, %v2119, %v1888
      %v2154 = vsel %vm2148, %v2121, %v1890
      %v2156 = vsel %vm2148, %v2123, %v1892
      %v2158 = vsel %vm2148, %v2125, %v1894
      %v2160 = vsel %vm2148, %v2127, %v1896
      %v2162 = vsel %vm2148, %v2129, %v1898
      %v2164 = vsel %vm2148, %v2131, %v1900
      %v2166 = vsel %vm2148, %v2133, %v1902
      %v2168 = vsel %vm2148, %v2135, %v1904
      %v2170 = vsel %vm2148, %v2137, %v1906
      %v2172 = vsel %vm2148, %v2139, %v1908
      %v2174 = vsel %vm2148, %v2141, %v1910
      %v2176 = vsel %vm2148, %v2143, %v1912
      %v2178 = vsel %vm2148, %v2145, %v1914
      %v2180 = vsel %vm2148, %v2147, %v1916
      %v2181 = vld [vmem:[%s1] sm:$0xf]
      %v2182 = vld [vmem:[%s1 + $0x4] sm:$0xf]
      %v2183 = vld [vmem:[%s1 + $0x8] sm:$0xf]
      %v2184 = vld [vmem:[%s1 + $0xc] sm:$0xf]
      %v2185 = vld [vmem:[%s1 + $0x10] sm:$0x3]
      %v2191 = vunpack.c.l.b16 %v2181
      %v2192 = vunpack.c.l.b16 %v2182
      %v2193 = vunpack.c.l.b16 %v2183
      %v2194 = vunpack.c.l.b16 %v2184
      %v2195 = vunpack.c.l.b16 %v2185
      %v2196 = vpack.c.b16 %v2192, %v2191
      %v2197 = vpack.c.b16 %v2194, %v2193
      %v2198 = vpack.c.b16 %v2195, %v2195
      %vm2201 = vcmask 293888
      %v2202 = vsel %vm2201, %v2150, 0
      %v2204 = vsel %vm2201, %v2152, 0
      %v2206 = vsel %vm2201, %v2154, 0
      %v2208 = vsel %vm2201, %v2156, 0
      %v2210 = vsel %vm2201, %v2158, 0
      %v2212 = vsel %vm2201, %v2160, 0
      %v2214 = vsel %vm2201, %v2162, 0
      %v2216 = vsel %vm2201, %v2164, 0
      %v2218 = vsel %vm2201, %v2166, 0
      %v2220 = vsel %vm2201, %v2168, 0
      %v2222 = vsel %vm2201, %v2170, 0
      %v2224 = vsel %vm2201, %v2172, 0
      %v2226 = vsel %vm2201, %v2174, 0
      %v2228 = vsel %vm2201, %v2176, 0
      %v2230 = vsel %vm2201, %v2178, 0
      %v2232 = vsel %vm2201, %v2180, 0
      %vm2234 = vcmask 1041408
      %v2236 = vsel %vm2234, %v2198, 0
      %2238 = vmatprep.subr.bf16.mxu0 0
      %2239 = vmatpush1.bf16.msra.mxu0 0
      %2240 = vmatprep.subr.bf16.mxu0 0
      %2241 = vmatpush1.bf16.msra.mxu0 0
      %2242 = vmatprep.subr.bf16.mxu0 0
      %2243 = vmatpush1.bf16.msra.mxu0 0
      %2244 = vmatprep.subr.bf16.mxu0 0
      %2245 = vmatpush1.bf16.msra.mxu0 0
      %2246 = vmatprep.subr.bf16.mxu0 0
      %2247 = vmatpush1.bf16.msra.mxu0 0
      %2248 = vmatprep.subr.bf16.mxu0 0
      %2249 = vmatpush1.bf16.msra.mxu0 %v2236
      %2250 = vmatprep.subr.bf16.mxu0 0
      %2251 = vmatpush1.bf16.msra.mxu0 %v2197
      %2252 = vmatprep.subr.bf16.mxu0 0
      %2253 = vmatpush1.bf16.msra.mxu0 %v2196
      %2254 = vmatprep.subr.bf16.mxu0 0
      %2255 = vmatpush2.bf16.msra.mxu0 0
      %2256 = vmatprep.subr.bf16.mxu0 0
      %2257 = vmatpush2.bf16.msra.mxu0 0
      %2258 = vmatprep.subr.bf16.mxu0 0
      %2259 = vmatpush2.bf16.msra.mxu0 0
      %2260 = vmatprep.subr.bf16.mxu0 0
      %2261 = vmatpush2.bf16.msra.mxu0 0
      %2262 = vmatprep.subr.bf16.mxu0 0
      %2263 = vmatpush2.bf16.msra.mxu0 0
      %2264 = vmatprep.subr.bf16.mxu0 0
      %2265 = vmatpush2.bf16.msra.mxu0 0
      %2266 = vmatprep.subr.bf16.mxu0 0
      %2267 = vmatpush2.bf16.msra.mxu0 0
      %2268 = vmatprep.subr.bf16.mxu0 0
      %2269 = vmatpush2.bf16.msra.mxu0 0
      %2270 = vmatprep.mubr.bf16.mxu0 0
      %2271 = vmatmul.mubr.bf16.gmra.mxu0 %v2202
      %v2272 = vpop.f32.mrf.mxu0
      %v2273 = vadd.f32 0.0, %v2272
      %v2274 = vpop.f32.mrf.mxu0
      %v2275 = vpop.f32.mrf.mxu0
      %v2276 = vadd.f32 0.0, %v2275
      %v2277 = vpop.f32.mrf.mxu0
      %2278 = vmatprep.mubr.bf16.mxu0 0
      %2279 = vmatmul.mubr.bf16.gmra.mxu0 %v2204
      %v2280 = vpop.f32.mrf.mxu0
      %v2281 = vadd.f32 0.0, %v2280
      %v2282 = vpop.f32.mrf.mxu0
      %v2283 = vpop.f32.mrf.mxu0
      %v2284 = vadd.f32 0.0, %v2283
      %v2285 = vpop.f32.mrf.mxu0
      %2286 = vmatprep.mubr.bf16.mxu0 0
      %2287 = vmatmul.mubr.bf16.gmra.mxu0 %v2206
      %v2288 = vpop.f32.mrf.mxu0
      %v2289 = vadd.f32 0.0, %v2288
      %v2290 = vpop.f32.mrf.mxu0
      %v2291 = vpop.f32.mrf.mxu0
      %v2292 = vadd.f32 0.0, %v2291
      %v2293 = vpop.f32.mrf.mxu0
      %2294 = vmatprep.mubr.bf16.mxu0 0
      %2295 = vmatmul.mubr.bf16.gmra.mxu0 %v2208
      %v2296 = vpop.f32.mrf.mxu0
      %v2297 = vadd.f32 0.0, %v2296
      %v2298 = vpop.f32.mrf.mxu0
      %v2299 = vpop.f32.mrf.mxu0
      %v2300 = vadd.f32 0.0, %v2299
      %v2301 = vpop.f32.mrf.mxu0
      %2302 = vmatprep.mubr.bf16.mxu0 0
      %2303 = vmatmul.mubr.bf16.gmra.mxu0 %v2210
      %v2304 = vpop.f32.mrf.mxu0
      %v2305 = vadd.f32 0.0, %v2304
      %v2306 = vpop.f32.mrf.mxu0
      %v2307 = vpop.f32.mrf.mxu0
      %v2308 = vadd.f32 0.0, %v2307
      %v2309 = vpop.f32.mrf.mxu0
      %2310 = vmatprep.mubr.bf16.mxu0 0
      %2311 = vmatmul.mubr.bf16.gmra.mxu0 %v2212
      %v2312 = vpop.f32.mrf.mxu0
      %v2313 = vadd.f32 0.0, %v2312
      %v2314 = vpop.f32.mrf.mxu0
      %v2315 = vpop.f32.mrf.mxu0
      %v2316 = vadd.f32 0.0, %v2315
      %v2317 = vpop.f32.mrf.mxu0
      %2318 = vmatprep.mubr.bf16.mxu0 0
      %2319 = vmatmul.mubr.bf16.gmra.mxu0 %v2214
      %v2320 = vpop.f32.mrf.mxu0
      %v2321 = vadd.f32 0.0, %v2320
      %v2322 = vpop.f32.mrf.mxu0
      %v2323 = vpop.f32.mrf.mxu0
      %v2324 = vadd.f32 0.0, %v2323
      %v2325 = vpop.f32.mrf.mxu0
      %2326 = vmatprep.mubr.bf16.mxu0 0
      %2327 = vmatmul.mubr.bf16.gmra.mxu0 %v2216
      %v2328 = vpop.f32.mrf.mxu0
      %v2329 = vadd.f32 0.0, %v2328
      %v2330 = vpop.f32.mrf.mxu0
      %v2331 = vpop.f32.mrf.mxu0
      %v2332 = vadd.f32 0.0, %v2331
      %v2333 = vpop.f32.mrf.mxu0
      %2334 = vmatprep.mubr.bf16.mxu0 0
      %2335 = vmatmul.mubr.bf16.gmra.mxu0 %v2218
      %v2336 = vpop.f32.mrf.mxu0
      %v2337 = vadd.f32 0.0, %v2336
      %v2338 = vpop.f32.mrf.mxu0
      %v2339 = vpop.f32.mrf.mxu0
      %v2340 = vadd.f32 0.0, %v2339
      %v2341 = vpop.f32.mrf.mxu0
      %2342 = vmatprep.mubr.bf16.mxu0 0
      %2343 = vmatmul.mubr.bf16.gmra.mxu0 %v2220
      %v2344 = vpop.f32.mrf.mxu0
      %v2345 = vadd.f32 0.0, %v2344
      %v2346 = vpop.f32.mrf.mxu0
      %v2347 = vpop.f32.mrf.mxu0
      %v2348 = vadd.f32 0.0, %v2347
      %v2349 = vpop.f32.mrf.mxu0
      %2350 = vmatprep.mubr.bf16.mxu0 0
      %2351 = vmatmul.mubr.bf16.gmra.mxu0 %v2222
      %v2352 = vpop.f32.mrf.mxu0
      %v2353 = vadd.f32 0.0, %v2352
      %v2354 = vpop.f32.mrf.mxu0
      %v2355 = vpop.f32.mrf.mxu0
      %v2356 = vadd.f32 0.0, %v2355
      %v2357 = vpop.f32.mrf.mxu0
      %2358 = vmatprep.mubr.bf16.mxu0 0
      %2359 = vmatmul.mubr.bf16.gmra.mxu0 %v2224
      %v2360 = vpop.f32.mrf.mxu0
      %v2361 = vadd.f32 0.0, %v2360
      %v2362 = vpop.f32.mrf.mxu0
      %v2363 = vpop.f32.mrf.mxu0
      %v2364 = vadd.f32 0.0, %v2363
      %v2365 = vpop.f32.mrf.mxu0
      %2366 = vmatprep.mubr.bf16.mxu0 0
      %2367 = vmatmul.mubr.bf16.gmra.mxu0 %v2226
      %v2368 = vpop.f32.mrf.mxu0
      %v2369 = vadd.f32 0.0, %v2368
      %v2370 = vpop.f32.mrf.mxu0
      %v2371 = vpop.f32.mrf.mxu0
      %v2372 = vadd.f32 0.0, %v2371
      %v2373 = vpop.f32.mrf.mxu0
      %2374 = vmatprep.mubr.bf16.mxu0 0
      %2375 = vmatmul.mubr.bf16.gmra.mxu0 %v2228
      %v2376 = vpop.f32.mrf.mxu0
      %v2377 = vadd.f32 0.0, %v2376
      %v2378 = vpop.f32.mrf.mxu0
      %v2379 = vpop.f32.mrf.mxu0
      %v2380 = vadd.f32 0.0, %v2379
      %v2381 = vpop.f32.mrf.mxu0
      %2382 = vmatprep.mubr.bf16.mxu0 0
      %2383 = vmatmul.mubr.bf16.gmra.mxu0 %v2230
      %v2384 = vpop.f32.mrf.mxu0
      %v2385 = vadd.f32 0.0, %v2384
      %v2386 = vpop.f32.mrf.mxu0
      %v2387 = vpop.f32.mrf.mxu0
      %v2388 = vadd.f32 0.0, %v2387
      %v2389 = vpop.f32.mrf.mxu0
      %2390 = vmatprep.mubr.bf16.mxu0 0
      %2391 = vmatmul.mubr.bf16.gmra.mxu0 %v2232
      %v2392 = vpop.f32.mrf.mxu0
      %v2393 = vadd.f32 0.0, %v2392
      %v2394 = vpop.f32.mrf.mxu0
      %v2395 = vpop.f32.mrf.mxu0
      %v2396 = vadd.f32 0.0, %v2395
      %v2397 = vpop.f32.mrf.mxu0
      %2398 = vdwg.mxu0
      %v2399 = vpack.c.bf16 %v2276, %v2273
      %v2400 = vpack.c.bf16 %v2284, %v2281
      %v2401 = vpack.c.bf16 %v2292, %v2289
      %v2402 = vpack.c.bf16 %v2300, %v2297
      %v2403 = vpack.c.bf16 %v2308, %v2305
      %v2404 = vpack.c.bf16 %v2316, %v2313
      %v2405 = vpack.c.bf16 %v2324, %v2321
      %v2406 = vpack.c.bf16 %v2332, %v2329
      %v2407 = vpack.c.bf16 %v2340, %v2337
      %v2408 = vpack.c.bf16 %v2348, %v2345
      %v2409 = vpack.c.bf16 %v2356, %v2353
      %v2410 = vpack.c.bf16 %v2364, %v2361
      %v2411 = vpack.c.bf16 %v2372, %v2369
      %v2412 = vpack.c.bf16 %v2380, %v2377
      %v2413 = vpack.c.bf16 %v2388, %v2385
      %v2414 = vpack.c.bf16 %v2396, %v2393
      %2415 = vxpose.xlu0.c.b16.start [1/8] %v2399, 128
      %2416 = vxpose.xlu0.c.b16.cont [2/8] %v2400, 128
      %2417 = vxpose.xlu0.c.b16.cont [3/8] %v2401, 128
      %2418 = vxpose.xlu0.c.b16.cont [4/8] %v2402, 128
      %2419 = vxpose.xlu0.c.b16.cont [5/8] %v2403, 128
      %2420 = vxpose.xlu0.c.b16.cont [6/8] %v2404, 128
      %2421 = vxpose.xlu0.c.b16.cont [7/8] %v2405, 128
      %2422 = vxpose.xlu0.c.b16.end [8/8] %v2406, 128
      %v2423 = vpop.trf.xlu0
      %v2424 = vpop.trf.xlu0
      %v2425 = vpop.trf.xlu0
      %v2426 = vpop.trf.xlu0
      %v2427 = vpop.trf.xlu0
      %v2428 = vpop.trf.xlu0
      %v2429 = vpop.trf.xlu0
      %v2430 = vpop.trf.xlu0
      %2431 = vxpose.xlu0.c.b16.start [1/8] %v2407, 128
      %2432 = vxpose.xlu0.c.b16.cont [2/8] %v2408, 128
      %2433 = vxpose.xlu0.c.b16.cont [3/8] %v2409, 128
      %2434 = vxpose.xlu0.c.b16.cont [4/8] %v2410, 128
      %2435 = vxpose.xlu0.c.b16.cont [5/8] %v2411, 128
      %2436 = vxpose.xlu0.c.b16.cont [6/8] %v2412, 128
      %2437 = vxpose.xlu0.c.b16.cont [7/8] %v2413, 128
      %2438 = vxpose.xlu0.c.b16.end [8/8] %v2414, 128
      %v2439 = vpop.trf.xlu0
      %v2440 = vpop.trf.xlu0
      %v2441 = vpop.trf.xlu0
      %v2442 = vpop.trf.xlu0
      %v2443 = vpop.trf.xlu0
      %v2444 = vpop.trf.xlu0
      %v2445 = vpop.trf.xlu0
      %v2446 = vpop.trf.xlu0
      %v2449 = vunpack.c.l.b16 %v2423
      %v2450 = vunpack.c.l.b16 %v2439
      %v2451 = vpack.c.b16 %v2450, %v2449
      %2453 = vst [vmem:[%s208] sm:$0xff] %v2451
      %v2454 = vunpack.c.l.bf16 %v2399
      %v2455 = vunpack.c.h.bf16 %v2399
      %v2456 = vunpack.c.l.bf16 %v2400
      %v2457 = vunpack.c.h.bf16 %v2400
      %v2458 = vunpack.c.l.bf16 %v2401
      %v2459 = vunpack.c.h.bf16 %v2401
      %v2460 = vunpack.c.l.bf16 %v2402
      %v2461 = vunpack.c.h.bf16 %v2402
      %v2462 = vunpack.c.l.bf16 %v2403
      %v2463 = vunpack.c.h.bf16 %v2403
      %v2464 = vunpack.c.l.bf16 %v2404
      %v2465 = vunpack.c.h.bf16 %v2404
      %v2466 = vunpack.c.l.bf16 %v2405
      %v2467 = vunpack.c.h.bf16 %v2405
      %v2468 = vunpack.c.l.bf16 %v2406
      %v2469 = vunpack.c.h.bf16 %v2406
      %v2470 = vunpack.c.l.bf16 %v2407
      %v2471 = vunpack.c.h.bf16 %v2407
      %v2472 = vunpack.c.l.bf16 %v2408
      %v2473 = vunpack.c.h.bf16 %v2408
      %v2474 = vunpack.c.l.bf16 %v2409
      %v2475 = vunpack.c.h.bf16 %v2409
      %v2476 = vunpack.c.l.bf16 %v2410
      %v2477 = vunpack.c.h.bf16 %v2410
      %v2478 = vunpack.c.l.bf16 %v2411
      %v2479 = vunpack.c.h.bf16 %v2411
      %v2480 = vunpack.c.l.bf16 %v2412
      %v2481 = vunpack.c.h.bf16 %v2412
      %v2482 = vunpack.c.l.bf16 %v2413
      %v2483 = vunpack.c.h.bf16 %v2413
      %v2484 = vunpack.c.l.bf16 %v2414
      %v2485 = vunpack.c.h.bf16 %v2414
      %v2486 = vsel %vm1950, %v2454, 0.0
      %v2487 = vsel %vm1950, %v2455, 0.0
      %v2488 = vadd.f32 %v2486, %v2487
      %v2489 = vsel %vm1950, %v2456, 0.0
      %v2490 = vadd.f32 %v2488, %v2489
      %v2491 = vsel %vm1950, %v2457, 0.0
      %v2492 = vadd.f32 %v2490, %v2491
      %v2493 = vsel %vm1950, %v2458, 0.0
      %v2494 = vadd.f32 %v2492, %v2493
      %v2495 = vsel %vm1950, %v2459, 0.0
      %v2496 = vadd.f32 %v2494, %v2495
      %v2497 = vsel %vm1950, %v2460, 0.0
      %v2498 = vadd.f32 %v2496, %v2497
      %v2499 = vsel %vm1950, %v2461, 0.0
      %v2500 = vadd.f32 %v2498, %v2499
      %v2501 = vsel %vm1950, %v2462, 0.0
      %v2502 = vadd.f32 %v2500, %v2501
      %v2503 = vsel %vm1950, %v2463, 0.0
      %v2504 = vadd.f32 %v2502, %v2503
      %v2505 = vsel %vm1950, %v2464, 0.0
      %v2506 = vadd.f32 %v2504, %v2505
      %v2507 = vsel %vm1950, %v2465, 0.0
      %v2508 = vadd.f32 %v2506, %v2507
      %v2509 = vsel %vm1950, %v2466, 0.0
      %v2510 = vadd.f32 %v2508, %v2509
      %v2511 = vsel %vm1950, %v2467, 0.0
      %v2512 = vadd.f32 %v2510, %v2511
      %v2513 = vsel %vm1950, %v2468, 0.0
      %v2514 = vadd.f32 %v2512, %v2513
      %v2515 = vsel %vm1950, %v2469, 0.0
      %v2516 = vadd.f32 %v2514, %v2515
      %v2517 = vsel %vm1950, %v2470, 0.0
      %v2518 = vadd.f32 %v2516, %v2517
      %v2519 = vsel %vm1950, %v2471, 0.0
      %v2520 = vadd.f32 %v2518, %v2519
      %v2521 = vsel %vm1950, %v2472, 0.0
      %v2522 = vadd.f32 %v2520, %v2521
      %v2523 = vsel %vm1950, %v2473, 0.0
      %v2524 = vadd.f32 %v2522, %v2523
      %v2525 = vsel %vm1950, %v2474, 0.0
      %v2526 = vadd.f32 %v2524, %v2525
      %v2527 = vsel %vm1950, %v2475, 0.0
      %v2528 = vadd.f32 %v2526, %v2527
      %v2529 = vsel %vm1950, %v2476, 0.0
      %v2530 = vadd.f32 %v2528, %v2529
      %v2531 = vsel %vm1950, %v2477, 0.0
      %v2532 = vadd.f32 %v2530, %v2531
      %v2533 = vsel %vm1950, %v2478, 0.0
      %v2534 = vadd.f32 %v2532, %v2533
      %v2535 = vsel %vm1950, %v2479, 0.0
      %v2536 = vadd.f32 %v2534, %v2535
      %v2537 = vsel %vm1950, %v2480, 0.0
      %v2538 = vadd.f32 %v2536, %v2537
      %v2539 = vsel %vm1950, %v2481, 0.0
      %v2540 = vadd.f32 %v2538, %v2539
      %v2541 = vsel %vm1950, %v2482, 0.0
      %v2542 = vadd.f32 %v2540, %v2541
      %v2543 = vsel %vm1950, %v2483, 0.0
      %v2544 = vadd.f32 %v2542, %v2543
      %v2545 = vsel %vm1950, %v2484, 0.0
      %v2546 = vadd.f32 %v2544, %v2545
      %v2547 = vsel %vm1950, %v2485, 0.0
      %v2548 = vadd.f32 %v2546, %v2547
      %v2549 = vrot.slane %v2548, 4
      %v2550 = vadd.f32 %v2548, %v2549
      %v2551 = vrot.slane %v2550, 2
      %v2552 = vadd.f32 %v2550, %v2551
      %v2553 = vrot.slane %v2552, 1
      %v2554 = vadd.f32 %v2552, %v2553
      %vm2555 = vcmask 57344
      %2556 = vst.msk [vmem:[%s212] sm:$0x1] %vm2555, %v2554
      %v2557 = vmul.f32 %v2454, %v2454
      %v2558 = vmul.f32 %v2455, %v2455
      %v2559 = vmul.f32 %v2456, %v2456
      %v2560 = vmul.f32 %v2457, %v2457
      %v2561 = vmul.f32 %v2458, %v2458
      %v2562 = vmul.f32 %v2459, %v2459
      %v2563 = vmul.f32 %v2460, %v2460
      %v2564 = vmul.f32 %v2461, %v2461
      %v2565 = vmul.f32 %v2462, %v2462
      %v2566 = vmul.f32 %v2463, %v2463
      %v2567 = vmul.f32 %v2464, %v2464
      %v2568 = vmul.f32 %v2465, %v2465
      %v2569 = vmul.f32 %v2466, %v2466
      %v2570 = vmul.f32 %v2467, %v2467
      %v2571 = vmul.f32 %v2468, %v2468
      %v2572 = vmul.f32 %v2469, %v2469
      %v2573 = vmul.f32 %v2470, %v2470
      %v2574 = vmul.f32 %v2471, %v2471
      %v2575 = vmul.f32 %v2472, %v2472
      %v2576 = vmul.f32 %v2473, %v2473
      %v2577 = vmul.f32 %v2474, %v2474
      %v2578 = vmul.f32 %v2475, %v2475
      %v2579 = vmul.f32 %v2476, %v2476
      %v2580 = vmul.f32 %v2477, %v2477
      %v2581 = vmul.f32 %v2478, %v2478
      %v2582 = vmul.f32 %v2479, %v2479
      %v2583 = vmul.f32 %v2480, %v2480
      %v2584 = vmul.f32 %v2481, %v2481
      %v2585 = vmul.f32 %v2482, %v2482
      %v2586 = vmul.f32 %v2483, %v2483
      %v2587 = vmul.f32 %v2484, %v2484
      %v2588 = vmul.f32 %v2485, %v2485
      %v2589 = vsel %vm1950, %v2557, 0.0
      %v2590 = vsel %vm1950, %v2558, 0.0
      %v2591 = vadd.f32 %v2589, %v2590
      %v2592 = vsel %vm1950, %v2559, 0.0
      %v2593 = vadd.f32 %v2591, %v2592
      %v2594 = vsel %vm1950, %v2560, 0.0
      %v2595 = vadd.f32 %v2593, %v2594
      %v2596 = vsel %vm1950, %v2561, 0.0
      %v2597 = vadd.f32 %v2595, %v2596
      %v2598 = vsel %vm1950, %v2562, 0.0
      %v2599 = vadd.f32 %v2597, %v2598
      %v2600 = vsel %vm1950, %v2563, 0.0
      %v2601 = vadd.f32 %v2599, %v2600
      %v2602 = vsel %vm1950, %v2564, 0.0
      %v2603 = vadd.f32 %v2601, %v2602
      %v2604 = vsel %vm1950, %v2565, 0.0
      %v2605 = vadd.f32 %v2603, %v2604
      %v2606 = vsel %vm1950, %v2566, 0.0
      %v2607 = vadd.f32 %v2605, %v2606
      %v2608 = vsel %vm1950, %v2567, 0.0
      %v2609 = vadd.f32 %v2607, %v2608
      %v2610 = vsel %vm1950, %v2568, 0.0
      %v2611 = vadd.f32 %v2609, %v2610
      %v2612 = vsel %vm1950, %v2569, 0.0
      %v2613 = vadd.f32 %v2611, %v2612
      %v2614 = vsel %vm1950, %v2570, 0.0
      %v2615 = vadd.f32 %v2613, %v2614
      %v2616 = vsel %vm1950, %v2571, 0.0
      %v2617 = vadd.f32 %v2615, %v2616
      %v2618 = vsel %vm1950, %v2572, 0.0
      %v2619 = vadd.f32 %v2617, %v2618
      %v2620 = vsel %vm1950, %v2573, 0.0
      %v2621 = vadd.f32 %v2619, %v2620
      %v2622 = vsel %vm1950, %v2574, 0.0
      %v2623 = vadd.f32 %v2621, %v2622
      %v2624 = vsel %vm1950, %v2575, 0.0
      %v2625 = vadd.f32 %v2623, %v2624
      %v2626 = vsel %vm1950, %v2576, 0.0
      %v2627 = vadd.f32 %v2625, %v2626
      %v2628 = vsel %vm1950, %v2577, 0.0
      %v2629 = vadd.f32 %v2627, %v2628
      %v2630 = vsel %vm1950, %v2578, 0.0
      %v2631 = vadd.f32 %v2629, %v2630
      %v2632 = vsel %vm1950, %v2579, 0.0
      %v2633 = vadd.f32 %v2631, %v2632
      %v2634 = vsel %vm1950, %v2580, 0.0
      %v2635 = vadd.f32 %v2633, %v2634
      %v2636 = vsel %vm1950, %v2581, 0.0
      %v2637 = vadd.f32 %v2635, %v2636
      %v2638 = vsel %vm1950, %v2582, 0.0
      %v2639 = vadd.f32 %v2637, %v2638
      %v2640 = vsel %vm1950, %v2583, 0.0
      %v2641 = vadd.f32 %v2639, %v2640
      %v2642 = vsel %vm1950, %v2584, 0.0
      %v2643 = vadd.f32 %v2641, %v2642
      %v2644 = vsel %vm1950, %v2585, 0.0
      %v2645 = vadd.f32 %v2643, %v2644
      %v2646 = vsel %vm1950, %v2586, 0.0
      %v2647 = vadd.f32 %v2645, %v2646
      %v2648 = vsel %vm1950, %v2587, 0.0
      %v2649 = vadd.f32 %v2647, %v2648
      %v2650 = vsel %vm1950, %v2588, 0.0
      %v2651 = vadd.f32 %v2649, %v2650
      %v2652 = vrot.slane %v2651, 4
      %v2653 = vadd.f32 %v2651, %v2652
      %v2654 = vrot.slane %v2653, 2
      %v2655 = vadd.f32 %v2653, %v2654
      %v2656 = vrot.slane %v2655, 1
      %v2657 = vadd.f32 %v2655, %v2656
      %2658 = vst.msk [vmem:[%s215] sm:$0x1] %vm2555, %v2657
      %s2659 = smul.u32 2, %s16
      %p2660 = scmp.lt.s32.totalorder %s2659, 3
      %s2661 = scalar_select %p2660, %s2659, 3
      %s2662 = smul.addr %s2661, 4
      %s2663 = scalar_lea.vmem %s2, %s2662
      %p2664 = scmp.lt.s32.totalorder %s16, 1
      %s2665 = scalar_select %p2664, %s16, 1
      %s2666 = scalar_lea.vmem %s3, %s2665
      %p2667 = scmp.lt.s32.totalorder %s16, 1
      %s2668 = scalar_select %p2667, %s16, 1
      %s2669 = scalar_lea.vmem %s4, %s2668
      // Predicated region
      $region29: #{conv_module_forward.2} parent=27 // pred_check
        %p2670 = pneg %p81
      $region30: #{conv_module_forward.2} parent=27 // pred_check_branch
        %2672 = sbr.rel (%p2670) target = $region32
      $region31: #{conv_module_forward.2} parent=27 // pred_region
        %s2673 = smul.u32 2, %s16
      $region32: #{conv_module_forward.2} parent=27 // pred_fallthru
        _
      // Predicated region
      $region33: #{conv_module_forward.2} parent=27 // pred_check
        %p2674 = pneg %p107
      $region34: #{conv_module_forward.2} parent=27 // pred_check_branch
        %2676 = sbr.rel (%p2674) target = $region36
      $region35: #{conv_module_forward.2} parent=27 // pred_region
        _
      $region36: #{conv_module_forward.2} parent=27 // pred_fallthru
        _
      // Predicated region
      $region37: #{conv_module_forward.2} parent=27 // pred_check
        %p2677 = pneg %p133
      $region38: #{conv_module_forward.2} parent=27 // pred_check_branch
        %2679 = sbr.rel (%p2677) target = $region40
      $region39: #{conv_module_forward.2} parent=27 // pred_region
        _
      $region40: #{conv_module_forward.2} parent=27 // pred_fallthru
        _
    $region28: #{conv_module_forward.2} parent=5 // pred_fallthru
      _
    %p2680 = scmp.le.s32.totalorder 2, %s11
    // Predicated region
    $region41: #{conv_module_forward.2} parent=5 // pred_check
      %p2681 = pneg %p2680
    $region42: #{conv_module_forward.2} parent=5 // pred_check_branch
      %2683 = sbr.rel (%p2681) target = $region44
    $region43: #{conv_module_forward.2} parent=5 // pred_region
      %s2684 = ssub.s32 %s11, 2
      // Predicated region
      $region45: #{conv_module_forward.2} parent=43 // pred_check
        %p2685 = pneg %p87
      $region46: #{conv_module_forward.2} parent=43 // pred_check_branch
        %2687 = sbr.rel (%p2685) target = $region48
      $region47: #{conv_module_forward.2} parent=43 // pred_region
        %s2688 = smul.u32 2, %s17
        %p2689 = scmp.lt.s32.totalorder %s2688, 3
        %s2690 = scalar_select %p2689, %s2688, 3
        %s2691 = smul.addr %s2690, 4
        %s2692 = scalar_lea.vmem %s2, %s2691
      $region48: #{conv_module_forward.2} parent=43 // pred_fallthru
        _
      // Predicated region
      $region49: #{conv_module_forward.2} parent=43 // pred_check
        %p2693 = pneg %p113
      $region50: #{conv_module_forward.2} parent=43 // pred_check_branch
        %2695 = sbr.rel (%p2693) target = $region52
      $region51: #{conv_module_forward.2} parent=43 // pred_region
        %p2696 = scmp.lt.s32.totalorder %s17, 1
        %s2697 = scalar_select %p2696, %s17, 1
        %s2698 = scalar_lea.vmem %s3, %s2697
      $region52: #{conv_module_forward.2} parent=43 // pred_fallthru
        _
      // Predicated region
      $region53: #{conv_module_forward.2} parent=43 // pred_check
        %p2699 = pneg %p139
      $region54: #{conv_module_forward.2} parent=43 // pred_check_branch
        %2701 = sbr.rel (%p2699) target = $region56
      $region55: #{conv_module_forward.2} parent=43 // pred_region
        %p2702 = scmp.lt.s32.totalorder %s17, 1
        %s2703 = scalar_select %p2702, %s17, 1
        %s2704 = scalar_lea.vmem %s4, %s2703
      $region56: #{conv_module_forward.2} parent=43 // pred_fallthru
        _
    $region44: #{conv_module_forward.2} parent=5 // pred_fallthru
      _
  $region6: #{conv_module_forward.2} parent=0 // loop_footer
    %s15 = sadd.s32 1, %s11
  $region7: #{conv_module_forward.2} parent=0 // loop_footer_branch
    %10 = sbr.rel target = $region3
  $region8: #{conv_module_forward.2} parent=0 // loop_exit
    _

</llo_original>
